<compile_context>
chip_gen: v5e
topology: v5e:2x2
jax: 0.10.0
libtpu: 0.0.40
codegen_flags: <defaults>
</compile_context>

<pallas_src>
import functools

import jax
import jax.numpy as jnp
from jax.experimental import pallas as pl
from jax.experimental.pallas import tpu as pltpu


# ----------------------------------------------------------------------------
# kernel: one batch element per grid step, all heads batched inside
# ----------------------------------------------------------------------------
def _mha_kernel(x_ref, wq_ref, wk_ref, wv_ref, wp_ref, bp_ref, *rest,
                num_heads, scale, has_mask):
    if has_mask:
        mask_ref, o_ref = rest
    else:
        (o_ref,) = rest

    x = x_ref[0]                                   # (N, C) bf16
    n, c = x.shape
    h = num_heads

    # hoisted once; gives a head-batched lhs so all matmuls use H as batch dim
    xh = jnp.broadcast_to(x, (h, n, c))            # (H, N, C) bf16

    def mm(lhs, rhs, eq):
        return jnp.einsum(eq, lhs, rhs, preferred_element_type=jnp.float32)

    # per-head projections: full-C contraction, no lane-axis slicing
    q = mm(xh, wq_ref[...], 'hnc,hcd->hnd').astype(jnp.bfloat16)   # (H, N, Dh)
    k = mm(xh, wk_ref[...], 'hnc,hcd->hnd').astype(jnp.bfloat16)   # (H, N, Dh)
    v = mm(xh, wv_ref[...], 'hnc,hcd->hnd').astype(jnp.bfloat16)   # (H, N, Dh)

    # attention scores (f32) + optional additive mask, softmax in f32
    s = mm(q, k, 'hnd,hmd->hnm') * scale                            # (H, N, N)
    if has_mask:
        s = s + mask_ref[0]                                         # (N, N) bcast over H
    m = jnp.max(s, axis=-1, keepdims=True)
    e = jnp.exp(s - m)
    p = e * pl.reciprocal(jnp.sum(e, axis=-1, keepdims=True), approx=True)

    # attn @ v, then concat-over-heads + proj == sum of per-head partial projections
    o = mm(p.astype(jnp.bfloat16), v, 'hnm,hmd->hnd').astype(jnp.bfloat16)  # (H, N, Dh)
    y = mm(o, wp_ref[...], 'hnd,hdc->hnc')                          # (H, N, C) f32
    y = jnp.sum(y, axis=0) + bp_ref[...]                            # (N, C) f32
    o_ref[0] = y.astype(o_ref.dtype)


# ----------------------------------------------------------------------------
# wrapper: host-side per-head weight stacking + bf16 casts + pallas_call
# ----------------------------------------------------------------------------
def attention_forward(x, params, mask=None, *, num_heads=8):
    B, N, C = x.shape
    assert C % num_heads == 0
    Dh = C // num_heads
    scale = float(Dh) ** -0.5                      # qk_scale=None default

    wqkv = params["wqkv"]                          # (C, 3C), y = x @ W convention

    def per_head(w):                               # (C, C) -> (H, C, Dh)
        return w.reshape(C, num_heads, Dh).transpose(1, 0, 2)

    wq = per_head(wqkv[:, :C]).astype(jnp.bfloat16)
    wk = per_head(wqkv[:, C:2 * C]).astype(jnp.bfloat16)
    wv = per_head(wqkv[:, 2 * C:]).astype(jnp.bfloat16)
    wp = params["wproj"].reshape(num_heads, Dh, C).astype(jnp.bfloat16)
    bp = params["bproj"].reshape(1, C).astype(jnp.float32)
    xb = x.astype(jnp.bfloat16)

    has_mask = mask is not None
    kernel = functools.partial(_mha_kernel, num_heads=num_heads, scale=scale,
                               has_mask=has_mask)

    bcast3 = lambda a: pl.BlockSpec(a.shape, lambda b: (0, 0, 0))
    in_specs = [
        pl.BlockSpec((1, N, C), lambda b: (b, 0, 0)),   # x
        bcast3(wq), bcast3(wk), bcast3(wv), bcast3(wp),
        pl.BlockSpec((1, C), lambda b: (0, 0)),         # proj bias
    ]
    args = [xb, wq, wk, wv, wp, bp]
    if has_mask:
        in_specs.append(pl.BlockSpec((1, N, N), lambda b: (b, 0, 0)))
        args.append(mask.astype(jnp.float32))

    return pl.pallas_call(
        kernel,
        out_shape=jax.ShapeDtypeStruct((B, N, C), jnp.float32),
        grid=(B,),
        in_specs=in_specs,
        out_specs=pl.BlockSpec((1, N, C), lambda b: (b, 0, 0)),
        compiler_params=pltpu.CompilerParams(dimension_semantics=("parallel",)),
    )(*args)


# ----------------------------------------------------------------------------
# pure-JAX reference mirroring the PyTorch module exactly (f32 everywhere)
# ----------------------------------------------------------------------------
def attention_reference(x, params, mask=None, *, num_heads=8):
    B, N, C = x.shape
    Dh = C // num_heads
    scale = float(Dh) ** -0.5
    qkv = x @ params["wqkv"]                                        # (B, N, 3C)
    qkv = qkv.reshape(B, N, 3, num_heads, Dh).transpose(2, 0, 3, 1, 4)
    q, k, v = qkv[0], qkv[1], qkv[2]                                # (B, H, N, Dh)
    attn = jnp.einsum('bhnd,bhmd->bhnm', q, k) * scale
    if mask is not None:
        attn = attn + mask.reshape(B, 1, N, N)
    attn = jax.nn.softmax(attn, axis=-1)
    out = jnp.einsum('bhnm,bhmd->bhnd', attn, v)
    out = out.transpose(0, 2, 1, 3).reshape(B, N, C)
    return out @ params["wproj"] + params["bproj"]


# ----------------------------------------------------------------------------
if __name__ == "__main__":
    key = jax.random.PRNGKey(0)
    B, N, C, H = 2, 16, 128, 8

    kx, kqkv, kpj, kb, km = jax.random.split(key, 5)
    x = jax.random.normal(kx, (B, N, C), jnp.float32)
    params = dict(
        wqkv=0.05 * jax.random.normal(kqkv, (C, 3 * C), jnp.float32),
        wproj=0.05 * jax.random.normal(kpj, (C, C), jnp.float32),
        bproj=0.05 * jax.random.normal(kb, (C,), jnp.float32),
    )
    mask = jax.random.normal(km, (B, N, N), jnp.float32)

    fwd = jax.jit(functools.partial(attention_forward, num_heads=H))

    out = fwd(x, params)             # mask=None path
    out_m = fwd(x, params, mask)     # masked path
    jax.block_until_ready((out, out_m))

    ref = attention_reference(x, params, num_heads=H)
    ref_m = attention_reference(x, params, mask, num_heads=H)

    assert out.shape == (B, N, C), out.shape
    assert bool(jnp.all(jnp.isfinite(out))) and bool(jnp.all(jnp.isfinite(out_m)))
    # tolerance covers bf16 matmul operands + approx reciprocal (f32 accumulation)
    assert bool(jnp.allclose(out, ref, atol=2e-2, rtol=2e-2)), \
        float(jnp.max(jnp.abs(out - ref)))
    assert bool(jnp.allclose(out_m, ref_m, atol=2e-2, rtol=2e-2)), \
        float(jnp.max(jnp.abs(out_m - ref_m)))
    print("KERNEL_OK")
</pallas_src>

<mosaic_0001>
module attributes {stable_mosaic.version = 11 : i64} {
  func.func @_mha_kernel(%arg0: i32, %arg1: memref<1x16x128xbf16, #tpu.memory_space<vmem>>, %arg2: memref<8x128x16xbf16, #tpu.memory_space<vmem>>, %arg3: memref<8x128x16xbf16, #tpu.memory_space<vmem>>, %arg4: memref<8x128x16xbf16, #tpu.memory_space<vmem>>, %arg5: memref<8x16x128xbf16, #tpu.memory_space<vmem>>, %arg6: memref<1x128xf32, #tpu.memory_space<vmem>>, %arg7: memref<1x16x128xf32, #tpu.memory_space<vmem>>) attributes {dimension_semantics = [#tpu.dimension_semantics<parallel>], iteration_bounds = array<i64: 2>, scalar_prefetch = 0 : i64, scratch_operands = 0 : i64, tpu.core_type = #tpu.core_type<tc>, window_params = [{transform_indices = @transform_0, window_bounds = array<i64: 1, 16, 128>}, {pipeline_mode = #tpu.pipeline_mode<synchronous>, transform_indices = @transform_1, window_bounds = array<i64: 8, 128, 16>}, {pipeline_mode = #tpu.pipeline_mode<synchronous>, transform_indices = @transform_2, window_bounds = array<i64: 8, 128, 16>}, {pipeline_mode = #tpu.pipeline_mode<synchronous>, transform_indices = @transform_3, window_bounds = array<i64: 8, 128, 16>}, {pipeline_mode = #tpu.pipeline_mode<synchronous>, transform_indices = @transform_4, window_bounds = array<i64: 8, 16, 128>}, {pipeline_mode = #tpu.pipeline_mode<synchronous>, transform_indices = @transform_5, window_bounds = array<i64: 1, 128>}, {transform_indices = @transform_6, window_bounds = array<i64: 1, 16, 128>}]} {
    %c0 = arith.constant 0 : index
    %c0_0 = arith.constant 0 : index
    %c0_1 = arith.constant 0 : index
    %0 = vector.load %arg1[%c0, %c0_0, %c0_1] : memref<1x16x128xbf16, #tpu.memory_space<vmem>>, vector<1x16x128xbf16>
    %1 = vector.shape_cast %0 : vector<1x16x128xbf16> to vector<16x128xbf16>
    %2 = vector.shape_cast %1 : vector<16x128xbf16> to vector<1x16x128xbf16>
    %3 = vector.broadcast %2 : vector<1x16x128xbf16> to vector<8x16x128xbf16>
    %c0_2 = arith.constant 0 : index
    %c0_3 = arith.constant 0 : index
    %c0_4 = arith.constant 0 : index
    %4 = vector.load %arg2[%c0_2, %c0_3, %c0_4] : memref<8x128x16xbf16, #tpu.memory_space<vmem>>, vector<8x128x16xbf16>
    "tpu.trace_start"() <{level = 10 : i32, message = "hnc,hcd->hnd"}> : () -> ()
    %cst = arith.constant dense<0.000000e+00> : vector<8x16x16xf32>
    %5 = tpu.matmul %3, %4, %cst {dimension_numbers = #tpu.dot_dimension_numbers<[2], [1], [1], [2], [0, 0, 0, 1, 1, 2], [0], [0]>} : vector<8x16x128xbf16>, vector<8x128x16xbf16>, vector<8x16x16xf32> -> vector<8x16x16xf32>
    "tpu.trace_stop"() : () -> ()
    %6 = arith.truncf %5 : vector<8x16x16xf32> to vector<8x16x16xbf16>
    %c0_5 = arith.constant 0 : index
    %c0_6 = arith.constant 0 : index
    %c0_7 = arith.constant 0 : index
    %7 = vector.load %arg3[%c0_5, %c0_6, %c0_7] : memref<8x128x16xbf16, #tpu.memory_space<vmem>>, vector<8x128x16xbf16>
    "tpu.trace_start"() <{level = 10 : i32, message = "hnc,hcd->hnd"}> : () -> ()
    %cst_8 = arith.constant dense<0.000000e+00> : vector<8x16x16xf32>
    %8 = tpu.matmul %3, %7, %cst_8 {dimension_numbers = #tpu.dot_dimension_numbers<[2], [1], [1], [2], [0, 0, 0, 1, 1, 2], [0], [0]>} : vector<8x16x128xbf16>, vector<8x128x16xbf16>, vector<8x16x16xf32> -> vector<8x16x16xf32>
    "tpu.trace_stop"() : () -> ()
    %9 = arith.truncf %8 : vector<8x16x16xf32> to vector<8x16x16xbf16>
    %c0_9 = arith.constant 0 : index
    %c0_10 = arith.constant 0 : index
    %c0_11 = arith.constant 0 : index
    %10 = vector.load %arg4[%c0_9, %c0_10, %c0_11] : memref<8x128x16xbf16, #tpu.memory_space<vmem>>, vector<8x128x16xbf16>
    "tpu.trace_start"() <{level = 10 : i32, message = "hnc,hcd->hnd"}> : () -> ()
    %cst_12 = arith.constant dense<0.000000e+00> : vector<8x16x16xf32>
    %11 = tpu.matmul %3, %10, %cst_12 {dimension_numbers = #tpu.dot_dimension_numbers<[2], [1], [1], [2], [0, 0, 0, 1, 1, 2], [0], [0]>} : vector<8x16x128xbf16>, vector<8x128x16xbf16>, vector<8x16x16xf32> -> vector<8x16x16xf32>
    "tpu.trace_stop"() : () -> ()
    %12 = arith.truncf %11 : vector<8x16x16xf32> to vector<8x16x16xbf16>
    "tpu.trace_start"() <{level = 10 : i32, message = "hnd,hmd->hnm"}> : () -> ()
    %cst_13 = arith.constant dense<0.000000e+00> : vector<8x16x16xf32>
    %13 = tpu.matmul %6, %9, %cst_13 {dimension_numbers = #tpu.dot_dimension_numbers<[2], [2], [1], [1], [0, 0, 0, 1, 1, 1], [0], [0]>} : vector<8x16x16xbf16>, vector<8x16x16xbf16>, vector<8x16x16xf32> -> vector<8x16x16xf32>
    "tpu.trace_stop"() : () -> ()
    %cst_14 = arith.constant 2.500000e-01 : f32
    %14 = vector.broadcast %cst_14 : f32 to vector<8x16x16xf32>
    %15 = arith.mulf %13, %14 : vector<8x16x16xf32>
    %cst_15 = arith.constant dense<0xFF800000> : vector<8x16xf32>
    %16 = vector.multi_reduction <maximumf>, %15, %cst_15 [2] : vector<8x16x16xf32> to vector<8x16xf32>
    %17 = vector.shape_cast %16 : vector<8x16xf32> to vector<8x16x1xf32>
    %18 = vector.broadcast %17 : vector<8x16x1xf32> to vector<8x16x16xf32>
    %19 = arith.subf %15, %18 : vector<8x16x16xf32>
    %20 = math.exp %19 : vector<8x16x16xf32>
    %cst_16 = arith.constant dense<0.000000e+00> : vector<8x16xf32>
    %21 = vector.multi_reduction <add>, %20, %cst_16 [2] : vector<8x16x16xf32> to vector<8x16xf32>
    %22 = vector.shape_cast %21 : vector<8x16xf32> to vector<8x16x1xf32>
    %23 = tpu.reciprocal %22 {approx = true} : vector<8x16x1xf32> -> vector<8x16x1xf32>
    %24 = vector.broadcast %23 : vector<8x16x1xf32> to vector<8x16x16xf32>
    %25 = arith.mulf %20, %24 : vector<8x16x16xf32>
    %26 = arith.truncf %25 : vector<8x16x16xf32> to vector<8x16x16xbf16>
    "tpu.trace_start"() <{level = 10 : i32, message = "hnm,hmd->hnd"}> : () -> ()
    %cst_17 = arith.constant dense<0.000000e+00> : vector<8x16x16xf32>
    %27 = tpu.matmul %26, %12, %cst_17 {dimension_numbers = #tpu.dot_dimension_numbers<[2], [1], [1], [2], [0, 0, 0, 1, 1, 2], [0], [0]>} : vector<8x16x16xbf16>, vector<8x16x16xbf16>, vector<8x16x16xf32> -> vector<8x16x16xf32>
    "tpu.trace_stop"() : () -> ()
    %28 = arith.truncf %27 : vector<8x16x16xf32> to vector<8x16x16xbf16>
    %c0_18 = arith.constant 0 : index
    %c0_19 = arith.constant 0 : index
    %c0_20 = arith.constant 0 : index
    %29 = vector.load %arg5[%c0_18, %c0_19, %c0_20] : memref<8x16x128xbf16, #tpu.memory_space<vmem>>, vector<8x16x128xbf16>
    "tpu.trace_start"() <{level = 10 : i32, message = "hnd,hdc->hnc"}> : () -> ()
    %cst_21 = arith.constant dense<0.000000e+00> : vector<8x16x128xf32>
    %30 = tpu.matmul %28, %29, %cst_21 {dimension_numbers = #tpu.dot_dimension_numbers<[2], [1], [1], [2], [0, 0, 0, 1, 1, 2], [0], [0]>} : vector<8x16x16xbf16>, vector<8x16x128xbf16>, vector<8x16x128xf32> -> vector<8x16x128xf32>
    "tpu.trace_stop"() : () -> ()
    %cst_22 = arith.constant dense<0.000000e+00> : vector<16x128xf32>
    %31 = vector.multi_reduction <add>, %30, %cst_22 [0] : vector<8x16x128xf32> to vector<16x128xf32>
    %c0_23 = arith.constant 0 : index
    %c0_24 = arith.constant 0 : index
    %32 = vector.load %arg6[%c0_23, %c0_24] : memref<1x128xf32, #tpu.memory_space<vmem>>, vector<1x128xf32>
    %33 = vector.broadcast %32 : vector<1x128xf32> to vector<16x128xf32>
    %34 = arith.addf %31, %33 : vector<16x128xf32>
    %c0_25 = arith.constant 0 : index
    %c0_26 = arith.constant 0 : index
    %c0_27 = arith.constant 0 : index
    %35 = vector.load %arg7[%c0_25, %c0_26, %c0_27] : memref<1x16x128xf32, #tpu.memory_space<vmem>>, vector<1x16x128xf32>
    %36 = vector.shape_cast %35 : vector<1x16x128xf32> to vector<16x128xf32>
    %37 = vector.shape_cast %34 : vector<16x128xf32> to vector<1x16x128xf32>
    tpu.vector_store %arg7[%c0_25, %c0_26, %c0_27], %37 {strides = array<i32>} : memref<1x16x128xf32, #tpu.memory_space<vmem>>, vector<1x16x128xf32>,
    return
  }
  func.func @transform_0(%arg0: i32) -> (i32, i32, i32) {
    %c0_i32 = arith.constant 0 : i32
    %c0_i32_0 = arith.constant 0 : i32
    %c0_i32_1 = arith.constant 0 : i32
    return %arg0, %c0_i32, %c0_i32_0 : i32, i32, i32
  }
  func.func @transform_1(%arg0: i32) -> (i32, i32, i32) {
    %c0_i32 = arith.constant 0 : i32
    %c0_i32_0 = arith.constant 0 : i32
    %c0_i32_1 = arith.constant 0 : i32
    %c0_i32_2 = arith.constant 0 : i32
    return %c0_i32, %c0_i32_0, %c0_i32_1 : i32, i32, i32
  }
  func.func @transform_2(%arg0: i32) -> (i32, i32, i32) {
    %c0_i32 = arith.constant 0 : i32
    %c0_i32_0 = arith.constant 0 : i32
    %c0_i32_1 = arith.constant 0 : i32
    %c0_i32_2 = arith.constant 0 : i32
    return %c0_i32, %c0_i32_0, %c0_i32_1 : i32, i32, i32
  }
  func.func @transform_3(%arg0: i32) -> (i32, i32, i32) {
    %c0_i32 = arith.constant 0 : i32
    %c0_i32_0 = arith.constant 0 : i32
    %c0_i32_1 = arith.constant 0 : i32
    %c0_i32_2 = arith.constant 0 : i32
    return %c0_i32, %c0_i32_0, %c0_i32_1 : i32, i32, i32
  }
  func.func @transform_4(%arg0: i32) -> (i32, i32, i32) {
    %c0_i32 = arith.constant 0 : i32
    %c0_i32_0 = arith.constant 0 : i32
    %c0_i32_1 = arith.constant 0 : i32
    %c0_i32_2 = arith.constant 0 : i32
    return %c0_i32, %c0_i32_0, %c0_i32_1 : i32, i32, i32
  }
  func.func @transform_5(%arg0: i32) -> (i32, i32) {
    %c0_i32 = arith.constant 0 : i32
    %c0_i32_0 = arith.constant 0 : i32
    %c0_i32_1 = arith.constant 0 : i32
    return %c0_i32, %c0_i32_0 : i32, i32
  }
  func.func @transform_6(%arg0: i32) -> (i32, i32, i32) {
    %c0_i32 = arith.constant 0 : i32
    %c0_i32_0 = arith.constant 0 : i32
    %c0_i32_1 = arith.constant 0 : i32
    return %arg0, %c0_i32, %c0_i32_0 : i32, i32, i32
  }
}

</mosaic_0001>

<llo_original>
// kernel: attention_forward.1
$region0: #{attention_forward.1}
  #allocation0 [shape = 'u32[]', space=smem, size = 0x4, offset = 0x4, fixed_abs, tag = 'smem constant byte address 0x4 - core index']
  #allocation1 [shape = 'u32[72,128]{1,0:T(1,128)}', space=vmem, size = 0x9000, scoped, tag = 'internal scratch']
  %s0 = inlined_call_operand.vmem [shape: bf16[2,16,128], index: 0, kind: input, shape index: {}]
  %s1 = inlined_call_operand.vmem [shape: bf16[8,128,16], index: 1, kind: input, shape index: {}]
  %s2 = inlined_call_operand.vmem [shape: bf16[8,128,16], index: 2, kind: input, shape index: {}]
  %s3 = inlined_call_operand.vmem [shape: bf16[8,128,16], index: 3, kind: input, shape index: {}]
  %s4 = inlined_call_operand.vmem [shape: bf16[8,16,128], index: 4, kind: input, shape index: {}]
  %s5 = inlined_call_operand.vmem [shape: f32[1,128], index: 5, kind: input, shape index: {}]
  %s6 = inlined_call_operand.hbm [shape: f32[2,16,128], index: 6, kind: output, shape index: {}]
  %s7 = sld [smem:[#allocation0]]
  $region57: #{attention_forward.1} parent=0
    _
  %s9 = ssub.s32 1, %s7
  %s10 = scalar_select 0, %s9, %s7
  $region1: #{attention_forward.1} parent=0
    #allocation2 [shape = 'u8[16384]{0}', space=vmem, size = 0x4000, scoped, tag = 'output window, operand 0']
    #allocation3 [shape = 's32[2]{0}', space=sflag, size = 0x8, scoped, tag = 'scoped memory for attention_forward.1']
    %11 = vsyncpa [#allocation3], 0
    %s12 = scalar_lea.sflag [#allocation3], 1
    %13 = vsyncpa %s12, 0
    loop: start=0, step=1, limit=4
    $region2: #{attention_forward.1} parent=1 // loop_pre_header
      _
    $region3: #{attention_forward.1} parent=1 // loop_header
      %s15 = sphi 0, %s19
      %p16 = scmp.ge.s32.totalorder %s15, 4
      %s25 = sphi 0, %s27
      %s28 = sphi 0, %s25
      %s29 = sphi 0, %s28
      %s45 = sphi 0, %s29
      %s49 = sphi 0, %s49
      %s51 = sphi 0, %s49
      %s52 = sphi 0, %s51
      %s66 = sphi 0, %s52
      %s70 = sphi 0, %s70
      %s72 = sphi 0, %s70
      %s73 = sphi 0, %s72
      %s87 = sphi 0, %s73
      %s91 = sphi 0, %s91
      %s93 = sphi 0, %s91
      %s94 = sphi 0, %s93
      %s108 = sphi 0, %s94
      %s112 = sphi 0, %s112
      %s114 = sphi 0, %s112
      %s115 = sphi 0, %s114
      %s129 = sphi 0, %s115
      %s133 = sphi 0, %s133
      %s135 = sphi 0, %s133
      %s136 = sphi 0, %s135
      %s150 = sphi 0, %s136
      %s156 = sphi 0, %s158
      %s159 = sphi 0, %s156
      %s160 = sphi 0, %s159
      %s176 = sphi 0, %s160
    $region4: #{attention_forward.1} parent=1 // loop_header_branch
      %18 = sbr.rel (%p16) target = $region8
    $region5: #{attention_forward.1} parent=1 // loop_body
      %s20 = ssub.s32 %s15, 1
      %s21 = ssub.s32 %s15, 2
      %s22 = sadd.s32 %s15, 1
      %s23 = ssub.s32 %s15, %s22
      %p24 = scmp.eq.s32.totalorder %s23, 0
      %s26 = sadd.s32 %s25, 1
      %s27 = scalar_select %p24, %s25, %s26
      %p30 = pneg %p24
      %p31 = scmp.eq.s32.totalorder %s15, 1
      %p32 = por %p30, %p31
      %p33 = scmp.ne.s32.totalorder %s25, %s28
      %p34 = scmp.eq.s32.totalorder %s15, 0
      %p35 = por %p33, %p34
      %p36 = scmp.ne.s32.totalorder %s25, %s28
      %p37 = scmp.eq.s32.totalorder %s20, 1
      %p38 = por %p36, %p37
      %p39 = scmp.ne.s32.totalorder %s28, %s29
      %p40 = scmp.eq.s32.totalorder %s20, 0
      %p41 = por %p39, %p40
      %p42 = scmp.ne.s32.totalorder %s28, %s29
      %p43 = scmp.eq.s32.totalorder %s21, 1
      %p44 = por %p42, %p43
      %p46 = scmp.ne.s32.totalorder %s29, %s45
      %p47 = scmp.eq.s32.totalorder %s21, 0
      %p48 = por %p46, %p47
      %s50 = sadd.s32 %s49, 1
      %p53 = scmp.eq.s32.totalorder %s15, 1
      %p54 = scmp.ne.s32.totalorder %s49, %s51
      %p55 = scmp.eq.s32.totalorder %s15, 0
      %p56 = por %p54, %p55
      %p57 = scmp.ne.s32.totalorder %s49, %s51
      %p58 = scmp.eq.s32.totalorder %s20, 1
      %p59 = por %p57, %p58
      %p60 = scmp.ne.s32.totalorder %s51, %s52
      %p61 = scmp.eq.s32.totalorder %s20, 0
      %p62 = por %p60, %p61
      %p63 = scmp.ne.s32.totalorder %s51, %s52
      %p64 = scmp.eq.s32.totalorder %s21, 1
      %p65 = por %p63, %p64
      %p67 = scmp.ne.s32.totalorder %s52, %s66
      %p68 = scmp.eq.s32.totalorder %s21, 0
      %p69 = por %p67, %p68
      %s71 = sadd.s32 %s70, 1
      %p74 = scmp.eq.s32.totalorder %s15, 1
      %p75 = scmp.ne.s32.totalorder %s70, %s72
      %p76 = scmp.eq.s32.totalorder %s15, 0
      %p77 = por %p75, %p76
      %p78 = scmp.ne.s32.totalorder %s70, %s72
      %p79 = scmp.eq.s32.totalorder %s20, 1
      %p80 = por %p78, %p79
      %p81 = scmp.ne.s32.totalorder %s72, %s73
      %p82 = scmp.eq.s32.totalorder %s20, 0
      %p83 = por %p81, %p82
      %p84 = scmp.ne.s32.totalorder %s72, %s73
      %p85 = scmp.eq.s32.totalorder %s21, 1
      %p86 = por %p84, %p85
      %p88 = scmp.ne.s32.totalorder %s73, %s87
      %p89 = scmp.eq.s32.totalorder %s21, 0
      %p90 = por %p88, %p89
      %s92 = sadd.s32 %s91, 1
      %p95 = scmp.eq.s32.totalorder %s15, 1
      %p96 = scmp.ne.s32.totalorder %s91, %s93
      %p97 = scmp.eq.s32.totalorder %s15, 0
      %p98 = por %p96, %p97
      %p99 = scmp.ne.s32.totalorder %s91, %s93
      %p100 = scmp.eq.s32.totalorder %s20, 1
      %p101 = por %p99, %p100
      %p102 = scmp.ne.s32.totalorder %s93, %s94
      %p103 = scmp.eq.s32.totalorder %s20, 0
      %p104 = por %p102, %p103
      %p105 = scmp.ne.s32.totalorder %s93, %s94
      %p106 = scmp.eq.s32.totalorder %s21, 1
      %p107 = por %p105, %p106
      %p109 = scmp.ne.s32.totalorder %s94, %s108
      %p110 = scmp.eq.s32.totalorder %s21, 0
      %p111 = por %p109, %p110
      %s113 = sadd.s32 %s112, 1
      %p116 = scmp.eq.s32.totalorder %s15, 1
      %p117 = scmp.ne.s32.totalorder %s112, %s114
      %p118 = scmp.eq.s32.totalorder %s15, 0
      %p119 = por %p117, %p118
      %p120 = scmp.ne.s32.totalorder %s112, %s114
      %p121 = scmp.eq.s32.totalorder %s20, 1
      %p122 = por %p120, %p121
      %p123 = scmp.ne.s32.totalorder %s114, %s115
      %p124 = scmp.eq.s32.totalorder %s20, 0
      %p125 = por %p123, %p124
      %p126 = scmp.ne.s32.totalorder %s114, %s115
      %p127 = scmp.eq.s32.totalorder %s21, 1
      %p128 = por %p126, %p127
      %p130 = scmp.ne.s32.totalorder %s115, %s129
      %p131 = scmp.eq.s32.totalorder %s21, 0
      %p132 = por %p130, %p131
      %s134 = sadd.s32 %s133, 1
      %p137 = scmp.eq.s32.totalorder %s15, 1
      %p138 = scmp.ne.s32.totalorder %s133, %s135
      %p139 = scmp.eq.s32.totalorder %s15, 0
      %p140 = por %p138, %p139
      %p141 = scmp.ne.s32.totalorder %s133, %s135
      %p142 = scmp.eq.s32.totalorder %s20, 1
      %p143 = por %p141, %p142
      %p144 = scmp.ne.s32.totalorder %s135, %s136
      %p145 = scmp.eq.s32.totalorder %s20, 0
      %p146 = por %p144, %p145
      %p147 = scmp.ne.s32.totalorder %s135, %s136
      %p148 = scmp.eq.s32.totalorder %s21, 1
      %p149 = por %p147, %p148
      %p151 = scmp.ne.s32.totalorder %s136, %s150
      %p152 = scmp.eq.s32.totalorder %s21, 0
      %p153 = por %p151, %p152
      %s154 = ssub.s32 %s15, %s22
      %p155 = scmp.eq.s32.totalorder %s154, 0
      %s157 = sadd.s32 %s156, 1
      %s158 = scalar_select %p155, %s156, %s157
      %p161 = pneg %p155
      %p162 = scmp.eq.s32.totalorder %s15, 1
      %p163 = por %p161, %p162
      %p164 = scmp.ne.s32.totalorder %s156, %s159
      %p165 = scmp.eq.s32.totalorder %s15, 0
      %p166 = por %p164, %p165
      %p167 = scmp.ne.s32.totalorder %s156, %s159
      %p168 = scmp.eq.s32.totalorder %s20, 1
      %p169 = por %p167, %p168
      %p170 = scmp.ne.s32.totalorder %s159, %s160
      %p171 = scmp.eq.s32.totalorder %s20, 0
      %p172 = por %p170, %p171
      %p173 = scmp.ne.s32.totalorder %s159, %s160
      %p174 = scmp.eq.s32.totalorder %s21, 1
      %p175 = por %p173, %p174
      %p177 = scmp.ne.s32.totalorder %s160, %s176
      %p178 = scmp.eq.s32.totalorder %s21, 0
      %p179 = por %p177, %p178
      %p180 = scmp.le.s32.totalorder 1, %s15
      %p181 = scmp.lt.s32.totalorder %s15, 3
      %p182 = pnand %p180, %p181
      %p183 = pneg %p182
      // Predicated region
      $region9: #{attention_forward.1} parent=5 // pred_check
        _
      $region10: #{attention_forward.1} parent=5 // pred_check_branch
        %185 = sbr.rel (%p182) target = $region12
      $region11: #{attention_forward.1} parent=5 // pred_region
        %s186 = ssub.s32 %s15, 1
        // Predicated region
        $region13: #{attention_forward.1} parent=11 // pred_check
          %p187 = pneg %p62
        $region14: #{attention_forward.1} parent=11 // pred_check_branch
          %189 = sbr.rel (%p187) target = $region16
        $region15: #{attention_forward.1} parent=11 // pred_region
          _
        $region16: #{attention_forward.1} parent=11 // pred_fallthru
          _
        // Predicated region
        $region17: #{attention_forward.1} parent=11 // pred_check
          %p190 = pneg %p83
        $region18: #{attention_forward.1} parent=11 // pred_check_branch
          %192 = sbr.rel (%p190) target = $region20
        $region19: #{attention_forward.1} parent=11 // pred_region
          _
        $region20: #{attention_forward.1} parent=11 // pred_fallthru
          _
        // Predicated region
        $region21: #{attention_forward.1} parent=11 // pred_check
          %p193 = pneg %p104
        $region22: #{attention_forward.1} parent=11 // pred_check_branch
          %195 = sbr.rel (%p193) target = $region24
        $region23: #{attention_forward.1} parent=11 // pred_region
          _
        $region24: #{attention_forward.1} parent=11 // pred_fallthru
          _
        // Predicated region
        $region25: #{attention_forward.1} parent=11 // pred_check
          %p196 = pneg %p125
        $region26: #{attention_forward.1} parent=11 // pred_check_branch
          %198 = sbr.rel (%p196) target = $region28
        $region27: #{attention_forward.1} parent=11 // pred_region
          _
        $region28: #{attention_forward.1} parent=11 // pred_fallthru
          _
        // Predicated region
        $region29: #{attention_forward.1} parent=11 // pred_check
          %p199 = pneg %p146
        $region30: #{attention_forward.1} parent=11 // pred_check_branch
          %201 = sbr.rel (%p199) target = $region32
        $region31: #{attention_forward.1} parent=11 // pred_region
          _
        $region32: #{attention_forward.1} parent=11 // pred_fallthru
          _
      $region12: #{attention_forward.1} parent=5 // pred_fallthru
        _
      %p202 = scmp.lt.s32.totalorder %s15, 2
      // Predicated region
      $region33: #{attention_forward.1} parent=5 // pred_check
        %p203 = pneg %p202
      $region34: #{attention_forward.1} parent=5 // pred_check_branch
        %205 = sbr.rel (%p203) target = $region36
      $region35: #{attention_forward.1} parent=5 // pred_region
        // Predicated region
        $region37: #{attention_forward.1} parent=35 // pred_check
          %p206 = pneg %p35
        $region38: #{attention_forward.1} parent=35 // pred_check_branch
          %208 = sbr.rel (%p206) target = $region40
        $region39: #{attention_forward.1} parent=35 // pred_region
          %p209 = scmp.lt.s32.totalorder %s15, 1
          %s210 = scalar_select %p209, %s15, 1
          %s211 = smul.addr %s210, 2
          %s212 = smul.addr %s211, 4
          %s213 = scalar_lea.vmem %s0, %s212
        $region40: #{attention_forward.1} parent=35 // pred_fallthru
          _
      $region36: #{attention_forward.1} parent=5 // pred_fallthru
        _
      %p214 = scmp.le.s32.totalorder 1, %s15
      %p215 = scmp.lt.s32.totalorder %s15, 3
      %p216 = pnand %p214, %p215
      %p217 = pneg %p216
      // Predicated region
      $region41: #{attention_forward.1} parent=5 // pred_check
        _
      $region42: #{attention_forward.1} parent=5 // pred_check_branch
        %219 = sbr.rel (%p216) target = $region44
      $region43: #{attention_forward.1} parent=5 // pred_region
        %s220 = ssub.s32 %s15, 1
        %p221 = scmp.lt.s32.totalorder %s20, 1
        %s222 = scalar_select %p221, %s20, 1
        %s223 = smul.addr %s222, 2
        %s224 = smul.addr %s223, 4
        %s225 = scalar_lea.vmem %s0, %s224
        %p226 = pneg %p41
        %p227 = pneg %p38
        %p228 = pneg %p62
        %p229 = pneg %p59
        %p230 = pneg %p83
        %p231 = pneg %p80
        %p232 = pneg %p104
        %p233 = pneg %p101
        %p234 = pneg %p125
        %p235 = pneg %p122
        %p236 = pneg %p146
        %p237 = pneg %p143
        %p238 = pneg %p172
        %p239 = pneg %p169
        %s240 = sand.u32 %s159, 1
        %s241 = scalar_lea.sflag [#allocation3], %s240
        %s242 = sand.u32 %s159, 1
        %s243 = smul.addr %s242, 16
        %s244 = scalar_lea.vmem [#allocation2], %s243
        %p245 = scmp.lt.s32.totalorder %s20, 1
        %s246 = scalar_select %p245, %s20, 1
        %s247 = smul.addr %s246, 2
        %s248 = smul.addr %s247, 4
        %s249 = scalar_lea.vmem %s0, %s248
        %v251 = vld [vmem:[%s249] sm:$0xf]
        %v252 = vld [vmem:[%s249 + $0x4] sm:$0xf]
        %v253 = vld [vmem:[%s1] sm:$0xf]
        %v254 = vld [vmem:[%s1 + $0x4] sm:$0xf]
        %v255 = vld [vmem:[%s1 + $0x8] sm:$0xf]
        %v256 = vld [vmem:[%s1 + $0xc] sm:$0xf]
        %v257 = vld [vmem:[%s1 + $0x10] sm:$0xf]
        %v258 = vld [vmem:[%s1 + $0x14] sm:$0xf]
        %v259 = vld [vmem:[%s1 + $0x18] sm:$0xf]
        %v260 = vld [vmem:[%s1 + $0x1c] sm:$0xf]
        %v261 = vld [vmem:[%s1 + $0x20] sm:$0xf]
        %v262 = vld [vmem:[%s1 + $0x24] sm:$0xf]
        %v263 = vld [vmem:[%s1 + $0x28] sm:$0xf]
        %v264 = vld [vmem:[%s1 + $0x2c] sm:$0xf]
        %v265 = vld [vmem:[%s1 + $0x30] sm:$0xf]
        %v266 = vld [vmem:[%s1 + $0x34] sm:$0xf]
        %v267 = vld [vmem:[%s1 + $0x38] sm:$0xf]
        %v268 = vld [vmem:[%s1 + $0x3c] sm:$0xf]
        %v269 = vld [vmem:[%s1 + $0x40] sm:$0xf]
        %v270 = vld [vmem:[%s1 + $0x44] sm:$0xf]
        %v271 = vld [vmem:[%s1 + $0x48] sm:$0xf]
        %v272 = vld [vmem:[%s1 + $0x4c] sm:$0xf]
        %v273 = vld [vmem:[%s1 + $0x50] sm:$0xf]
        %v274 = vld [vmem:[%s1 + $0x54] sm:$0xf]
        %v275 = vld [vmem:[%s1 + $0x58] sm:$0xf]
        %v276 = vld [vmem:[%s1 + $0x5c] sm:$0xf]
        %v277 = vld [vmem:[%s1 + $0x60] sm:$0xf]
        %v278 = vld [vmem:[%s1 + $0x64] sm:$0xf]
        %v279 = vld [vmem:[%s1 + $0x68] sm:$0xf]
        %v280 = vld [vmem:[%s1 + $0x6c] sm:$0xf]
        %v281 = vld [vmem:[%s1 + $0x70] sm:$0xf]
        %v282 = vld [vmem:[%s1 + $0x74] sm:$0xf]
        %v283 = vld [vmem:[%s1 + $0x78] sm:$0xf]
        %v284 = vld [vmem:[%s1 + $0x7c] sm:$0xf]
        %v285 = vld [vmem:[%s1 + $0x80] sm:$0xf]
        %v286 = vld [vmem:[%s1 + $0x84] sm:$0xf]
        %v287 = vld [vmem:[%s1 + $0x88] sm:$0xf]
        %v288 = vld [vmem:[%s1 + $0x8c] sm:$0xf]
        %v289 = vld [vmem:[%s1 + $0x90] sm:$0xf]
        %v290 = vld [vmem:[%s1 + $0x94] sm:$0xf]
        %v291 = vld [vmem:[%s1 + $0x98] sm:$0xf]
        %v292 = vld [vmem:[%s1 + $0x9c] sm:$0xf]
        %v293 = vld [vmem:[%s1 + $0xa0] sm:$0xf]
        %v294 = vld [vmem:[%s1 + $0xa4] sm:$0xf]
        %v295 = vld [vmem:[%s1 + $0xa8] sm:$0xf]
        %v296 = vld [vmem:[%s1 + $0xac] sm:$0xf]
        %v297 = vld [vmem:[%s1 + $0xb0] sm:$0xf]
        %v298 = vld [vmem:[%s1 + $0xb4] sm:$0xf]
        %v299 = vld [vmem:[%s1 + $0xb8] sm:$0xf]
        %v300 = vld [vmem:[%s1 + $0xbc] sm:$0xf]
        %v301 = vld [vmem:[%s1 + $0xc0] sm:$0xf]
        %v302 = vld [vmem:[%s1 + $0xc4] sm:$0xf]
        %v303 = vld [vmem:[%s1 + $0xc8] sm:$0xf]
        %v304 = vld [vmem:[%s1 + $0xcc] sm:$0xf]
        %v305 = vld [vmem:[%s1 + $0xd0] sm:$0xf]
        %v306 = vld [vmem:[%s1 + $0xd4] sm:$0xf]
        %v307 = vld [vmem:[%s1 + $0xd8] sm:$0xf]
        %v308 = vld [vmem:[%s1 + $0xdc] sm:$0xf]
        %v309 = vld [vmem:[%s1 + $0xe0] sm:$0xf]
        %v310 = vld [vmem:[%s1 + $0xe4] sm:$0xf]
        %v311 = vld [vmem:[%s1 + $0xe8] sm:$0xf]
        %v312 = vld [vmem:[%s1 + $0xec] sm:$0xf]
        %v313 = vld [vmem:[%s1 + $0xf0] sm:$0xf]
        %v314 = vld [vmem:[%s1 + $0xf4] sm:$0xf]
        %v315 = vld [vmem:[%s1 + $0xf8] sm:$0xf]
        %v316 = vld [vmem:[%s1 + $0xfc] sm:$0xf]
        %v317 = vld [vmem:[%s1 + $0x100] sm:$0xf]
        %v318 = vld [vmem:[%s1 + $0x104] sm:$0xf]
        %v319 = vld [vmem:[%s1 + $0x108] sm:$0xf]
        %v320 = vld [vmem:[%s1 + $0x10c] sm:$0xf]
        %v321 = vld [vmem:[%s1 + $0x110] sm:$0xf]
        %v322 = vld [vmem:[%s1 + $0x114] sm:$0xf]
        %v323 = vld [vmem:[%s1 + $0x118] sm:$0xf]
        %v324 = vld [vmem:[%s1 + $0x11c] sm:$0xf]
        %v325 = vld [vmem:[%s1 + $0x120] sm:$0xf]
        %v326 = vld [vmem:[%s1 + $0x124] sm:$0xf]
        %v327 = vld [vmem:[%s1 + $0x128] sm:$0xf]
        %v328 = vld [vmem:[%s1 + $0x12c] sm:$0xf]
        %v329 = vld [vmem:[%s1 + $0x130] sm:$0xf]
        %v330 = vld [vmem:[%s1 + $0x134] sm:$0xf]
        %v331 = vld [vmem:[%s1 + $0x138] sm:$0xf]
        %v332 = vld [vmem:[%s1 + $0x13c] sm:$0xf]
        %v333 = vld [vmem:[%s1 + $0x140] sm:$0xf]
        %v334 = vld [vmem:[%s1 + $0x144] sm:$0xf]
        %v335 = vld [vmem:[%s1 + $0x148] sm:$0xf]
        %v336 = vld [vmem:[%s1 + $0x14c] sm:$0xf]
        %v337 = vld [vmem:[%s1 + $0x150] sm:$0xf]
        %v338 = vld [vmem:[%s1 + $0x154] sm:$0xf]
        %v339 = vld [vmem:[%s1 + $0x158] sm:$0xf]
        %v340 = vld [vmem:[%s1 + $0x15c] sm:$0xf]
        %v341 = vld [vmem:[%s1 + $0x160] sm:$0xf]
        %v342 = vld [vmem:[%s1 + $0x164] sm:$0xf]
        %v343 = vld [vmem:[%s1 + $0x168] sm:$0xf]
        %v344 = vld [vmem:[%s1 + $0x16c] sm:$0xf]
        %v345 = vld [vmem:[%s1 + $0x170] sm:$0xf]
        %v346 = vld [vmem:[%s1 + $0x174] sm:$0xf]
        %v347 = vld [vmem:[%s1 + $0x178] sm:$0xf]
        %v348 = vld [vmem:[%s1 + $0x17c] sm:$0xf]
        %v349 = vld [vmem:[%s1 + $0x180] sm:$0xf]
        %v350 = vld [vmem:[%s1 + $0x184] sm:$0xf]
        %v351 = vld [vmem:[%s1 + $0x188] sm:$0xf]
        %v352 = vld [vmem:[%s1 + $0x18c] sm:$0xf]
        %v353 = vld [vmem:[%s1 + $0x190] sm:$0xf]
        %v354 = vld [vmem:[%s1 + $0x194] sm:$0xf]
        %v355 = vld [vmem:[%s1 + $0x198] sm:$0xf]
        %v356 = vld [vmem:[%s1 + $0x19c] sm:$0xf]
        %v357 = vld [vmem:[%s1 + $0x1a0] sm:$0xf]
        %v358 = vld [vmem:[%s1 + $0x1a4] sm:$0xf]
        %v359 = vld [vmem:[%s1 + $0x1a8] sm:$0xf]
        %v360 = vld [vmem:[%s1 + $0x1ac] sm:$0xf]
        %v361 = vld [vmem:[%s1 + $0x1b0] sm:$0xf]
        %v362 = vld [vmem:[%s1 + $0x1b4] sm:$0xf]
        %v363 = vld [vmem:[%s1 + $0x1b8] sm:$0xf]
        %v364 = vld [vmem:[%s1 + $0x1bc] sm:$0xf]
        %v365 = vld [vmem:[%s1 + $0x1c0] sm:$0xf]
        %v366 = vld [vmem:[%s1 + $0x1c4] sm:$0xf]
        %v367 = vld [vmem:[%s1 + $0x1c8] sm:$0xf]
        %v368 = vld [vmem:[%s1 + $0x1cc] sm:$0xf]
        %v369 = vld [vmem:[%s1 + $0x1d0] sm:$0xf]
        %v370 = vld [vmem:[%s1 + $0x1d4] sm:$0xf]
        %v371 = vld [vmem:[%s1 + $0x1d8] sm:$0xf]
        %v372 = vld [vmem:[%s1 + $0x1dc] sm:$0xf]
        %v373 = vld [vmem:[%s1 + $0x1e0] sm:$0xf]
        %v374 = vld [vmem:[%s1 + $0x1e4] sm:$0xf]
        %v375 = vld [vmem:[%s1 + $0x1e8] sm:$0xf]
        %v376 = vld [vmem:[%s1 + $0x1ec] sm:$0xf]
        %v377 = vld [vmem:[%s1 + $0x1f0] sm:$0xf]
        %v378 = vld [vmem:[%s1 + $0x1f4] sm:$0xf]
        %v379 = vld [vmem:[%s1 + $0x1f8] sm:$0xf]
        %v380 = vld [vmem:[%s1 + $0x1fc] sm:$0xf]
        %v383 = vunpack.c.l.b16 %v251
        %v384 = vunpack.c.l.b16 %v252
        %v385 = vpack.c.b16 %v384, %v383
        %v403 = vunpack.c.l.b16 %v253
        %v404 = vunpack.c.l.b16 %v254
        %v405 = vunpack.c.l.b16 %v255
        %v406 = vunpack.c.l.b16 %v256
        %v407 = vunpack.c.l.b16 %v257
        %v408 = vunpack.c.l.b16 %v258
        %v409 = vunpack.c.l.b16 %v259
        %v410 = vunpack.c.l.b16 %v260
        %v411 = vunpack.c.l.b16 %v261
        %v412 = vunpack.c.l.b16 %v262
        %v413 = vunpack.c.l.b16 %v263
        %v414 = vunpack.c.l.b16 %v264
        %v415 = vunpack.c.l.b16 %v265
        %v416 = vunpack.c.l.b16 %v266
        %v417 = vunpack.c.l.b16 %v267
        %v418 = vunpack.c.l.b16 %v268
        %v419 = vpack.c.b16 %v404, %v403
        %v420 = vpack.c.b16 %v406, %v405
        %v421 = vpack.c.b16 %v408, %v407
        %v422 = vpack.c.b16 %v410, %v409
        %v423 = vpack.c.b16 %v412, %v411
        %v424 = vpack.c.b16 %v414, %v413
        %v425 = vpack.c.b16 %v416, %v415
        %v426 = vpack.c.b16 %v418, %v417
        %435 = vmatpush.bf16.msra.mxu0 %v426
        %436 = vmatpush.bf16.msra.mxu0 %v425
        %437 = vmatpush.bf16.msra.mxu0 %v424
        %438 = vmatpush.bf16.msra.mxu0 %v423
        %439 = vmatpush.bf16.msra.mxu0 %v422
        %440 = vmatpush.bf16.msra.mxu0 %v421
        %441 = vmatpush.bf16.msra.mxu0 %v420
        %442 = vmatpush.bf16.msra.mxu0 %v419
        %443 = vmatmul.bf16.gmra.mxu0 %v385
        %v444 = vpop.f32.mrf.mxu0
        %v445 = vadd.f32 0.0, %v444
        %v446 = vpop.f32.mrf.mxu0
        %v447 = vadd.f32 0.0, %v446
        %448 = vdwg.mxu0
        %v465 = vunpack.c.l.b16 %v269
        %v466 = vunpack.c.l.b16 %v270
        %v467 = vunpack.c.l.b16 %v271
        %v468 = vunpack.c.l.b16 %v272
        %v469 = vunpack.c.l.b16 %v273
        %v470 = vunpack.c.l.b16 %v274
        %v471 = vunpack.c.l.b16 %v275
        %v472 = vunpack.c.l.b16 %v276
        %v473 = vunpack.c.l.b16 %v277
        %v474 = vunpack.c.l.b16 %v278
        %v475 = vunpack.c.l.b16 %v279
        %v476 = vunpack.c.l.b16 %v280
        %v477 = vunpack.c.l.b16 %v281
        %v478 = vunpack.c.l.b16 %v282
        %v479 = vunpack.c.l.b16 %v283
        %v480 = vunpack.c.l.b16 %v284
        %v481 = vpack.c.b16 %v466, %v465
        %v482 = vpack.c.b16 %v468, %v467
        %v483 = vpack.c.b16 %v470, %v469
        %v484 = vpack.c.b16 %v472, %v471
        %v485 = vpack.c.b16 %v474, %v473
        %v486 = vpack.c.b16 %v476, %v475
        %v487 = vpack.c.b16 %v478, %v477
        %v488 = vpack.c.b16 %v480, %v479
        %497 = vmatpush.bf16.msra.mxu0 %v488
        %498 = vmatpush.bf16.msra.mxu0 %v487
        %499 = vmatpush.bf16.msra.mxu0 %v486
        %500 = vmatpush.bf16.msra.mxu0 %v485
        %501 = vmatpush.bf16.msra.mxu0 %v484
        %502 = vmatpush.bf16.msra.mxu0 %v483
        %503 = vmatpush.bf16.msra.mxu0 %v482
        %504 = vmatpush.bf16.msra.mxu0 %v481
        %505 = vmatmul.bf16.gmra.mxu0 %v385
        %v506 = vpop.f32.mrf.mxu0
        %v507 = vadd.f32 0.0, %v506
        %v508 = vpop.f32.mrf.mxu0
        %v509 = vadd.f32 0.0, %v508
        %510 = vdwg.mxu0
        %v527 = vunpack.c.l.b16 %v285
        %v528 = vunpack.c.l.b16 %v286
        %v529 = vunpack.c.l.b16 %v287
        %v530 = vunpack.c.l.b16 %v288
        %v531 = vunpack.c.l.b16 %v289
        %v532 = vunpack.c.l.b16 %v290
        %v533 = vunpack.c.l.b16 %v291
        %v534 = vunpack.c.l.b16 %v292
        %v535 = vunpack.c.l.b16 %v293
        %v536 = vunpack.c.l.b16 %v294
        %v537 = vunpack.c.l.b16 %v295
        %v538 = vunpack.c.l.b16 %v296
        %v539 = vunpack.c.l.b16 %v297
        %v540 = vunpack.c.l.b16 %v298
        %v541 = vunpack.c.l.b16 %v299
        %v542 = vunpack.c.l.b16 %v300
        %v543 = vpack.c.b16 %v528, %v527
        %v544 = vpack.c.b16 %v530, %v529
        %v545 = vpack.c.b16 %v532, %v531
        %v546 = vpack.c.b16 %v534, %v533
        %v547 = vpack.c.b16 %v536, %v535
        %v548 = vpack.c.b16 %v538, %v537
        %v549 = vpack.c.b16 %v540, %v539
        %v550 = vpack.c.b16 %v542, %v541
        %559 = vmatpush.bf16.msra.mxu0 %v550
        %560 = vmatpush.bf16.msra.mxu0 %v549
        %561 = vmatpush.bf16.msra.mxu0 %v548
        %562 = vmatpush.bf16.msra.mxu0 %v547
        %563 = vmatpush.bf16.msra.mxu0 %v546
        %564 = vmatpush.bf16.msra.mxu0 %v545
        %565 = vmatpush.bf16.msra.mxu0 %v544
        %566 = vmatpush.bf16.msra.mxu0 %v543
        %567 = vmatmul.bf16.gmra.mxu0 %v385
        %v568 = vpop.f32.mrf.mxu0
        %v569 = vadd.f32 0.0, %v568
        %v570 = vpop.f32.mrf.mxu0
        %v571 = vadd.f32 0.0, %v570
        %572 = vdwg.mxu0
        %v589 = vunpack.c.l.b16 %v301
        %v590 = vunpack.c.l.b16 %v302
        %v591 = vunpack.c.l.b16 %v303
        %v592 = vunpack.c.l.b16 %v304
        %v593 = vunpack.c.l.b16 %v305
        %v594 = vunpack.c.l.b16 %v306
        %v595 = vunpack.c.l.b16 %v307
        %v596 = vunpack.c.l.b16 %v308
        %v597 = vunpack.c.l.b16 %v309
        %v598 = vunpack.c.l.b16 %v310
        %v599 = vunpack.c.l.b16 %v311
        %v600 = vunpack.c.l.b16 %v312
        %v601 = vunpack.c.l.b16 %v313
        %v602 = vunpack.c.l.b16 %v314
        %v603 = vunpack.c.l.b16 %v315
        %v604 = vunpack.c.l.b16 %v316
        %v605 = vpack.c.b16 %v590, %v589
        %v606 = vpack.c.b16 %v592, %v591
        %v607 = vpack.c.b16 %v594, %v593
        %v608 = vpack.c.b16 %v596, %v595
        %v609 = vpack.c.b16 %v598, %v597
        %v610 = vpack.c.b16 %v600, %v599
        %v611 = vpack.c.b16 %v602, %v601
        %v612 = vpack.c.b16 %v604, %v603
        %621 = vmatpush.bf16.msra.mxu0 %v612
        %622 = vmatpush.bf16.msra.mxu0 %v611
        %623 = vmatpush.bf16.msra.mxu0 %v610
        %624 = vmatpush.bf16.msra.mxu0 %v609
        %625 = vmatpush.bf16.msra.mxu0 %v608
        %626 = vmatpush.bf16.msra.mxu0 %v607
        %627 = vmatpush.bf16.msra.mxu0 %v606
        %628 = vmatpush.bf16.msra.mxu0 %v605
        %629 = vmatmul.bf16.gmra.mxu0 %v385
        %v630 = vpop.f32.mrf.mxu0
        %v631 = vadd.f32 0.0, %v630
        %v632 = vpop.f32.mrf.mxu0
        %v633 = vadd.f32 0.0, %v632
        %634 = vdwg.mxu0
        %v651 = vunpack.c.l.b16 %v317
        %v652 = vunpack.c.l.b16 %v318
        %v653 = vunpack.c.l.b16 %v319
        %v654 = vunpack.c.l.b16 %v320
        %v655 = vunpack.c.l.b16 %v321
        %v656 = vunpack.c.l.b16 %v322
        %v657 = vunpack.c.l.b16 %v323
        %v658 = vunpack.c.l.b16 %v324
        %v659 = vunpack.c.l.b16 %v325
        %v660 = vunpack.c.l.b16 %v326
        %v661 = vunpack.c.l.b16 %v327
        %v662 = vunpack.c.l.b16 %v328
        %v663 = vunpack.c.l.b16 %v329
        %v664 = vunpack.c.l.b16 %v330
        %v665 = vunpack.c.l.b16 %v331
        %v666 = vunpack.c.l.b16 %v332
        %v667 = vpack.c.b16 %v652, %v651
        %v668 = vpack.c.b16 %v654, %v653
        %v669 = vpack.c.b16 %v656, %v655
        %v670 = vpack.c.b16 %v658, %v657
        %v671 = vpack.c.b16 %v660, %v659
        %v672 = vpack.c.b16 %v662, %v661
        %v673 = vpack.c.b16 %v664, %v663
        %v674 = vpack.c.b16 %v666, %v665
        %683 = vmatpush.bf16.msra.mxu0 %v674
        %684 = vmatpush.bf16.msra.mxu0 %v673
        %685 = vmatpush.bf16.msra.mxu0 %v672
        %686 = vmatpush.bf16.msra.mxu0 %v671
        %687 = vmatpush.bf16.msra.mxu0 %v670
        %688 = vmatpush.bf16.msra.mxu0 %v669
        %689 = vmatpush.bf16.msra.mxu0 %v668
        %690 = vmatpush.bf16.msra.mxu0 %v667
        %691 = vmatmul.bf16.gmra.mxu0 %v385
        %v692 = vpop.f32.mrf.mxu0
        %v693 = vadd.f32 0.0, %v692
        %v694 = vpop.f32.mrf.mxu0
        %v695 = vadd.f32 0.0, %v694
        %696 = vdwg.mxu0
        %v713 = vunpack.c.l.b16 %v333
        %v714 = vunpack.c.l.b16 %v334
        %v715 = vunpack.c.l.b16 %v335
        %v716 = vunpack.c.l.b16 %v336
        %v717 = vunpack.c.l.b16 %v337
        %v718 = vunpack.c.l.b16 %v338
        %v719 = vunpack.c.l.b16 %v339
        %v720 = vunpack.c.l.b16 %v340
        %v721 = vunpack.c.l.b16 %v341
        %v722 = vunpack.c.l.b16 %v342
        %v723 = vunpack.c.l.b16 %v343
        %v724 = vunpack.c.l.b16 %v344
        %v725 = vunpack.c.l.b16 %v345
        %v726 = vunpack.c.l.b16 %v346
        %v727 = vunpack.c.l.b16 %v347
        %v728 = vunpack.c.l.b16 %v348
        %v729 = vpack.c.b16 %v714, %v713
        %v730 = vpack.c.b16 %v716, %v715
        %v731 = vpack.c.b16 %v718, %v717
        %v732 = vpack.c.b16 %v720, %v719
        %v733 = vpack.c.b16 %v722, %v721
        %v734 = vpack.c.b16 %v724, %v723
        %v735 = vpack.c.b16 %v726, %v725
        %v736 = vpack.c.b16 %v728, %v727
        %745 = vmatpush.bf16.msra.mxu0 %v736
        %746 = vmatpush.bf16.msra.mxu0 %v735
        %747 = vmatpush.bf16.msra.mxu0 %v734
        %748 = vmatpush.bf16.msra.mxu0 %v733
        %749 = vmatpush.bf16.msra.mxu0 %v732
        %750 = vmatpush.bf16.msra.mxu0 %v731
        %751 = vmatpush.bf16.msra.mxu0 %v730
        %752 = vmatpush.bf16.msra.mxu0 %v729
        %753 = vmatmul.bf16.gmra.mxu0 %v385
        %v754 = vpop.f32.mrf.mxu0
        %v755 = vadd.f32 0.0, %v754
        %v756 = vpop.f32.mrf.mxu0
        %v757 = vadd.f32 0.0, %v756
        %758 = vdwg.mxu0
        %v775 = vunpack.c.l.b16 %v349
        %v776 = vunpack.c.l.b16 %v350
        %v777 = vunpack.c.l.b16 %v351
        %v778 = vunpack.c.l.b16 %v352
        %v779 = vunpack.c.l.b16 %v353
        %v780 = vunpack.c.l.b16 %v354
        %v781 = vunpack.c.l.b16 %v355
        %v782 = vunpack.c.l.b16 %v356
        %v783 = vunpack.c.l.b16 %v357
        %v784 = vunpack.c.l.b16 %v358
        %v785 = vunpack.c.l.b16 %v359
        %v786 = vunpack.c.l.b16 %v360
        %v787 = vunpack.c.l.b16 %v361
        %v788 = vunpack.c.l.b16 %v362
        %v789 = vunpack.c.l.b16 %v363
        %v790 = vunpack.c.l.b16 %v364
        %v791 = vpack.c.b16 %v776, %v775
        %v792 = vpack.c.b16 %v778, %v777
        %v793 = vpack.c.b16 %v780, %v779
        %v794 = vpack.c.b16 %v782, %v781
        %v795 = vpack.c.b16 %v784, %v783
        %v796 = vpack.c.b16 %v786, %v785
        %v797 = vpack.c.b16 %v788, %v787
        %v798 = vpack.c.b16 %v790, %v789
        %807 = vmatpush.bf16.msra.mxu0 %v798
        %808 = vmatpush.bf16.msra.mxu0 %v797
        %809 = vmatpush.bf16.msra.mxu0 %v796
        %810 = vmatpush.bf16.msra.mxu0 %v795
        %811 = vmatpush.bf16.msra.mxu0 %v794
        %812 = vmatpush.bf16.msra.mxu0 %v793
        %813 = vmatpush.bf16.msra.mxu0 %v792
        %814 = vmatpush.bf16.msra.mxu0 %v791
        %815 = vmatmul.bf16.gmra.mxu0 %v385
        %v816 = vpop.f32.mrf.mxu0
        %v817 = vadd.f32 0.0, %v816
        %v818 = vpop.f32.mrf.mxu0
        %v819 = vadd.f32 0.0, %v818
        %820 = vdwg.mxu0
        %v837 = vunpack.c.l.b16 %v365
        %v838 = vunpack.c.l.b16 %v366
        %v839 = vunpack.c.l.b16 %v367
        %v840 = vunpack.c.l.b16 %v368
        %v841 = vunpack.c.l.b16 %v369
        %v842 = vunpack.c.l.b16 %v370
        %v843 = vunpack.c.l.b16 %v371
        %v844 = vunpack.c.l.b16 %v372
        %v845 = vunpack.c.l.b16 %v373
        %v846 = vunpack.c.l.b16 %v374
        %v847 = vunpack.c.l.b16 %v375
        %v848 = vunpack.c.l.b16 %v376
        %v849 = vunpack.c.l.b16 %v377
        %v850 = vunpack.c.l.b16 %v378
        %v851 = vunpack.c.l.b16 %v379
        %v852 = vunpack.c.l.b16 %v380
        %v853 = vpack.c.b16 %v838, %v837
        %v854 = vpack.c.b16 %v840, %v839
        %v855 = vpack.c.b16 %v842, %v841
        %v856 = vpack.c.b16 %v844, %v843
        %v857 = vpack.c.b16 %v846, %v845
        %v858 = vpack.c.b16 %v848, %v847
        %v859 = vpack.c.b16 %v850, %v849
        %v860 = vpack.c.b16 %v852, %v851
        %869 = vmatpush.bf16.msra.mxu0 %v860
        %870 = vmatpush.bf16.msra.mxu0 %v859
        %871 = vmatpush.bf16.msra.mxu0 %v858
        %872 = vmatpush.bf16.msra.mxu0 %v857
        %873 = vmatpush.bf16.msra.mxu0 %v856
        %874 = vmatpush.bf16.msra.mxu0 %v855
        %875 = vmatpush.bf16.msra.mxu0 %v854
        %876 = vmatpush.bf16.msra.mxu0 %v853
        %877 = vmatmul.bf16.gmra.mxu0 %v385
        %v878 = vpop.f32.mrf.mxu0
        %v879 = vadd.f32 0.0, %v878
        %v880 = vpop.f32.mrf.mxu0
        %v881 = vadd.f32 0.0, %v880
        %882 = vdwg.mxu0
        %v883 = vpack.c.bf16 %v445, %v445
        %v884 = vpack.c.bf16 %v447, %v447
        %v885 = vpack.c.bf16 %v507, %v507
        %v886 = vpack.c.bf16 %v509, %v509
        %v887 = vpack.c.bf16 %v569, %v569
        %v888 = vpack.c.bf16 %v571, %v571
        %v889 = vpack.c.bf16 %v631, %v631
        %v890 = vpack.c.bf16 %v633, %v633
        %v891 = vpack.c.bf16 %v693, %v693
        %v892 = vpack.c.bf16 %v695, %v695
        %v893 = vpack.c.bf16 %v755, %v755
        %v894 = vpack.c.bf16 %v757, %v757
        %v895 = vpack.c.bf16 %v817, %v817
        %v896 = vpack.c.bf16 %v819, %v819
        %v897 = vpack.c.bf16 %v879, %v879
        %v898 = vpack.c.bf16 %v881, %v881
        %v899 = vld [vmem:[%s2] sm:$0xf]
        %v900 = vld [vmem:[%s2 + $0x4] sm:$0xf]
        %v901 = vld [vmem:[%s2 + $0x8] sm:$0xf]
        %v902 = vld [vmem:[%s2 + $0xc] sm:$0xf]
        %v903 = vld [vmem:[%s2 + $0x10] sm:$0xf]
        %v904 = vld [vmem:[%s2 + $0x14] sm:$0xf]
        %v905 = vld [vmem:[%s2 + $0x18] sm:$0xf]
        %v906 = vld [vmem:[%s2 + $0x1c] sm:$0xf]
        %v907 = vld [vmem:[%s2 + $0x20] sm:$0xf]
        %v908 = vld [vmem:[%s2 + $0x24] sm:$0xf]
        %v909 = vld [vmem:[%s2 + $0x28] sm:$0xf]
        %v910 = vld [vmem:[%s2 + $0x2c] sm:$0xf]
        %v911 = vld [vmem:[%s2 + $0x30] sm:$0xf]
        %v912 = vld [vmem:[%s2 + $0x34] sm:$0xf]
        %v913 = vld [vmem:[%s2 + $0x38] sm:$0xf]
        %v914 = vld [vmem:[%s2 + $0x3c] sm:$0xf]
        %v915 = vld [vmem:[%s2 + $0x40] sm:$0xf]
        %v916 = vld [vmem:[%s2 + $0x44] sm:$0xf]
        %v917 = vld [vmem:[%s2 + $0x48] sm:$0xf]
        %v918 = vld [vmem:[%s2 + $0x4c] sm:$0xf]
        %v919 = vld [vmem:[%s2 + $0x50] sm:$0xf]
        %v920 = vld [vmem:[%s2 + $0x54] sm:$0xf]
        %v921 = vld [vmem:[%s2 + $0x58] sm:$0xf]
        %v922 = vld [vmem:[%s2 + $0x5c] sm:$0xf]
        %v923 = vld [vmem:[%s2 + $0x60] sm:$0xf]
        %v924 = vld [vmem:[%s2 + $0x64] sm:$0xf]
        %v925 = vld [vmem:[%s2 + $0x68] sm:$0xf]
        %v926 = vld [vmem:[%s2 + $0x6c] sm:$0xf]
        %v927 = vld [vmem:[%s2 + $0x70] sm:$0xf]
        %v928 = vld [vmem:[%s2 + $0x74] sm:$0xf]
        %v929 = vld [vmem:[%s2 + $0x78] sm:$0xf]
        %v930 = vld [vmem:[%s2 + $0x7c] sm:$0xf]
        %v931 = vld [vmem:[%s2 + $0x80] sm:$0xf]
        %v932 = vld [vmem:[%s2 + $0x84] sm:$0xf]
        %v933 = vld [vmem:[%s2 + $0x88] sm:$0xf]
        %v934 = vld [vmem:[%s2 + $0x8c] sm:$0xf]
        %v935 = vld [vmem:[%s2 + $0x90] sm:$0xf]
        %v936 = vld [vmem:[%s2 + $0x94] sm:$0xf]
        %v937 = vld [vmem:[%s2 + $0x98] sm:$0xf]
        %v938 = vld [vmem:[%s2 + $0x9c] sm:$0xf]
        %v939 = vld [vmem:[%s2 + $0xa0] sm:$0xf]
        %v940 = vld [vmem:[%s2 + $0xa4] sm:$0xf]
        %v941 = vld [vmem:[%s2 + $0xa8] sm:$0xf]
        %v942 = vld [vmem:[%s2 + $0xac] sm:$0xf]
        %v943 = vld [vmem:[%s2 + $0xb0] sm:$0xf]
        %v944 = vld [vmem:[%s2 + $0xb4] sm:$0xf]
        %v945 = vld [vmem:[%s2 + $0xb8] sm:$0xf]
        %v946 = vld [vmem:[%s2 + $0xbc] sm:$0xf]
        %v947 = vld [vmem:[%s2 + $0xc0] sm:$0xf]
        %v948 = vld [vmem:[%s2 + $0xc4] sm:$0xf]
        %v949 = vld [vmem:[%s2 + $0xc8] sm:$0xf]
        %v950 = vld [vmem:[%s2 + $0xcc] sm:$0xf]
        %v951 = vld [vmem:[%s2 + $0xd0] sm:$0xf]
        %v952 = vld [vmem:[%s2 + $0xd4] sm:$0xf]
        %v953 = vld [vmem:[%s2 + $0xd8] sm:$0xf]
        %v954 = vld [vmem:[%s2 + $0xdc] sm:$0xf]
        %v955 = vld [vmem:[%s2 + $0xe0] sm:$0xf]
        %v956 = vld [vmem:[%s2 + $0xe4] sm:$0xf]
        %v957 = vld [vmem:[%s2 + $0xe8] sm:$0xf]
        %v958 = vld [vmem:[%s2 + $0xec] sm:$0xf]
        %v959 = vld [vmem:[%s2 + $0xf0] sm:$0xf]
        %v960 = vld [vmem:[%s2 + $0xf4] sm:$0xf]
        %v961 = vld [vmem:[%s2 + $0xf8] sm:$0xf]
        %v962 = vld [vmem:[%s2 + $0xfc] sm:$0xf]
        %v963 = vld [vmem:[%s2 + $0x100] sm:$0xf]
        %v964 = vld [vmem:[%s2 + $0x104] sm:$0xf]
        %v965 = vld [vmem:[%s2 + $0x108] sm:$0xf]
        %v966 = vld [vmem:[%s2 + $0x10c] sm:$0xf]
        %v967 = vld [vmem:[%s2 + $0x110] sm:$0xf]
        %v968 = vld [vmem:[%s2 + $0x114] sm:$0xf]
        %v969 = vld [vmem:[%s2 + $0x118] sm:$0xf]
        %v970 = vld [vmem:[%s2 + $0x11c] sm:$0xf]
        %v971 = vld [vmem:[%s2 + $0x120] sm:$0xf]
        %v972 = vld [vmem:[%s2 + $0x124] sm:$0xf]
        %v973 = vld [vmem:[%s2 + $0x128] sm:$0xf]
        %v974 = vld [vmem:[%s2 + $0x12c] sm:$0xf]
        %v975 = vld [vmem:[%s2 + $0x130] sm:$0xf]
        %v976 = vld [vmem:[%s2 + $0x134] sm:$0xf]
        %v977 = vld [vmem:[%s2 + $0x138] sm:$0xf]
        %v978 = vld [vmem:[%s2 + $0x13c] sm:$0xf]
        %v979 = vld [vmem:[%s2 + $0x140] sm:$0xf]
        %v980 = vld [vmem:[%s2 + $0x144] sm:$0xf]
        %v981 = vld [vmem:[%s2 + $0x148] sm:$0xf]
        %v982 = vld [vmem:[%s2 + $0x14c] sm:$0xf]
        %v983 = vld [vmem:[%s2 + $0x150] sm:$0xf]
        %v984 = vld [vmem:[%s2 + $0x154] sm:$0xf]
        %v985 = vld [vmem:[%s2 + $0x158] sm:$0xf]
        %v986 = vld [vmem:[%s2 + $0x15c] sm:$0xf]
        %v987 = vld [vmem:[%s2 + $0x160] sm:$0xf]
        %v988 = vld [vmem:[%s2 + $0x164] sm:$0xf]
        %v989 = vld [vmem:[%s2 + $0x168] sm:$0xf]
        %v990 = vld [vmem:[%s2 + $0x16c] sm:$0xf]
        %v991 = vld [vmem:[%s2 + $0x170] sm:$0xf]
        %v992 = vld [vmem:[%s2 + $0x174] sm:$0xf]
        %v993 = vld [vmem:[%s2 + $0x178] sm:$0xf]
        %v994 = vld [vmem:[%s2 + $0x17c] sm:$0xf]
        %v995 = vld [vmem:[%s2 + $0x180] sm:$0xf]
        %v996 = vld [vmem:[%s2 + $0x184] sm:$0xf]
        %v997 = vld [vmem:[%s2 + $0x188] sm:$0xf]
        %v998 = vld [vmem:[%s2 + $0x18c] sm:$0xf]
        %v999 = vld [vmem:[%s2 + $0x190] sm:$0xf]
        %v1000 = vld [vmem:[%s2 + $0x194] sm:$0xf]
        %v1001 = vld [vmem:[%s2 + $0x198] sm:$0xf]
        %v1002 = vld [vmem:[%s2 + $0x19c] sm:$0xf]
        %v1003 = vld [vmem:[%s2 + $0x1a0] sm:$0xf]
        %v1004 = vld [vmem:[%s2 + $0x1a4] sm:$0xf]
        %v1005 = vld [vmem:[%s2 + $0x1a8] sm:$0xf]
        %v1006 = vld [vmem:[%s2 + $0x1ac] sm:$0xf]
        %v1007 = vld [vmem:[%s2 + $0x1b0] sm:$0xf]
        %v1008 = vld [vmem:[%s2 + $0x1b4] sm:$0xf]
        %v1009 = vld [vmem:[%s2 + $0x1b8] sm:$0xf]
        %v1010 = vld [vmem:[%s2 + $0x1bc] sm:$0xf]
        %v1011 = vld [vmem:[%s2 + $0x1c0] sm:$0xf]
        %v1012 = vld [vmem:[%s2 + $0x1c4] sm:$0xf]
        %v1013 = vld [vmem:[%s2 + $0x1c8] sm:$0xf]
        %v1014 = vld [vmem:[%s2 + $0x1cc] sm:$0xf]
        %v1015 = vld [vmem:[%s2 + $0x1d0] sm:$0xf]
        %v1016 = vld [vmem:[%s2 + $0x1d4] sm:$0xf]
        %v1017 = vld [vmem:[%s2 + $0x1d8] sm:$0xf]
        %v1018 = vld [vmem:[%s2 + $0x1dc] sm:$0xf]
        %v1019 = vld [vmem:[%s2 + $0x1e0] sm:$0xf]
        %v1020 = vld [vmem:[%s2 + $0x1e4] sm:$0xf]
        %v1021 = vld [vmem:[%s2 + $0x1e8] sm:$0xf]
        %v1022 = vld [vmem:[%s2 + $0x1ec] sm:$0xf]
        %v1023 = vld [vmem:[%s2 + $0x1f0] sm:$0xf]
        %v1024 = vld [vmem:[%s2 + $0x1f4] sm:$0xf]
        %v1025 = vld [vmem:[%s2 + $0x1f8] sm:$0xf]
        %v1026 = vld [vmem:[%s2 + $0x1fc] sm:$0xf]
        %v1043 = vunpack.c.l.b16 %v899
        %v1044 = vunpack.c.l.b16 %v900
        %v1045 = vunpack.c.l.b16 %v901
        %v1046 = vunpack.c.l.b16 %v902
        %v1047 = vunpack.c.l.b16 %v903
        %v1048 = vunpack.c.l.b16 %v904
        %v1049 = vunpack.c.l.b16 %v905
        %v1050 = vunpack.c.l.b16 %v906
        %v1051 = vunpack.c.l.b16 %v907
        %v1052 = vunpack.c.l.b16 %v908
        %v1053 = vunpack.c.l.b16 %v909
        %v1054 = vunpack.c.l.b16 %v910
        %v1055 = vunpack.c.l.b16 %v911
        %v1056 = vunpack.c.l.b16 %v912
        %v1057 = vunpack.c.l.b16 %v913
        %v1058 = vunpack.c.l.b16 %v914
        %v1059 = vpack.c.b16 %v1044, %v1043
        %v1060 = vpack.c.b16 %v1046, %v1045
        %v1061 = vpack.c.b16 %v1048, %v1047
        %v1062 = vpack.c.b16 %v1050, %v1049
        %v1063 = vpack.c.b16 %v1052, %v1051
        %v1064 = vpack.c.b16 %v1054, %v1053
        %v1065 = vpack.c.b16 %v1056, %v1055
        %v1066 = vpack.c.b16 %v1058, %v1057
        %1075 = vmatpush.bf16.msra.mxu0 %v1066
        %1076 = vmatpush.bf16.msra.mxu0 %v1065
        %1077 = vmatpush.bf16.msra.mxu0 %v1064
        %1078 = vmatpush.bf16.msra.mxu0 %v1063
        %1079 = vmatpush.bf16.msra.mxu0 %v1062
        %1080 = vmatpush.bf16.msra.mxu0 %v1061
        %1081 = vmatpush.bf16.msra.mxu0 %v1060
        %1082 = vmatpush.bf16.msra.mxu0 %v1059
        %1083 = vmatmul.bf16.gmra.mxu0 %v385
        %v1084 = vpop.f32.mrf.mxu0
        %v1085 = vadd.f32 0.0, %v1084
        %v1086 = vpop.f32.mrf.mxu0
        %v1087 = vadd.f32 0.0, %v1086
        %1088 = vdwg.mxu0
        %v1105 = vunpack.c.l.b16 %v915
        %v1106 = vunpack.c.l.b16 %v916
        %v1107 = vunpack.c.l.b16 %v917
        %v1108 = vunpack.c.l.b16 %v918
        %v1109 = vunpack.c.l.b16 %v919
        %v1110 = vunpack.c.l.b16 %v920
        %v1111 = vunpack.c.l.b16 %v921
        %v1112 = vunpack.c.l.b16 %v922
        %v1113 = vunpack.c.l.b16 %v923
        %v1114 = vunpack.c.l.b16 %v924
        %v1115 = vunpack.c.l.b16 %v925
        %v1116 = vunpack.c.l.b16 %v926
        %v1117 = vunpack.c.l.b16 %v927
        %v1118 = vunpack.c.l.b16 %v928
        %v1119 = vunpack.c.l.b16 %v929
        %v1120 = vunpack.c.l.b16 %v930
        %v1121 = vpack.c.b16 %v1106, %v1105
        %v1122 = vpack.c.b16 %v1108, %v1107
        %v1123 = vpack.c.b16 %v1110, %v1109
        %v1124 = vpack.c.b16 %v1112, %v1111
        %v1125 = vpack.c.b16 %v1114, %v1113
        %v1126 = vpack.c.b16 %v1116, %v1115
        %v1127 = vpack.c.b16 %v1118, %v1117
        %v1128 = vpack.c.b16 %v1120, %v1119
        %1137 = vmatpush.bf16.msra.mxu0 %v1128
        %1138 = vmatpush.bf16.msra.mxu0 %v1127
        %1139 = vmatpush.bf16.msra.mxu0 %v1126
        %1140 = vmatpush.bf16.msra.mxu0 %v1125
        %1141 = vmatpush.bf16.msra.mxu0 %v1124
        %1142 = vmatpush.bf16.msra.mxu0 %v1123
        %1143 = vmatpush.bf16.msra.mxu0 %v1122
        %1144 = vmatpush.bf16.msra.mxu0 %v1121
        %1145 = vmatmul.bf16.gmra.mxu0 %v385
        %v1146 = vpop.f32.mrf.mxu0
        %v1147 = vadd.f32 0.0, %v1146
        %v1148 = vpop.f32.mrf.mxu0
        %v1149 = vadd.f32 0.0, %v1148
        %1150 = vdwg.mxu0
        %v1167 = vunpack.c.l.b16 %v931
        %v1168 = vunpack.c.l.b16 %v932
        %v1169 = vunpack.c.l.b16 %v933
        %v1170 = vunpack.c.l.b16 %v934
        %v1171 = vunpack.c.l.b16 %v935
        %v1172 = vunpack.c.l.b16 %v936
        %v1173 = vunpack.c.l.b16 %v937
        %v1174 = vunpack.c.l.b16 %v938
        %v1175 = vunpack.c.l.b16 %v939
        %v1176 = vunpack.c.l.b16 %v940
        %v1177 = vunpack.c.l.b16 %v941
        %v1178 = vunpack.c.l.b16 %v942
        %v1179 = vunpack.c.l.b16 %v943
        %v1180 = vunpack.c.l.b16 %v944
        %v1181 = vunpack.c.l.b16 %v945
        %v1182 = vunpack.c.l.b16 %v946
        %v1183 = vpack.c.b16 %v1168, %v1167
        %v1184 = vpack.c.b16 %v1170, %v1169
        %v1185 = vpack.c.b16 %v1172, %v1171
        %v1186 = vpack.c.b16 %v1174, %v1173
        %v1187 = vpack.c.b16 %v1176, %v1175
        %v1188 = vpack.c.b16 %v1178, %v1177
        %v1189 = vpack.c.b16 %v1180, %v1179
        %v1190 = vpack.c.b16 %v1182, %v1181
        %1199 = vmatpush.bf16.msra.mxu0 %v1190
        %1200 = vmatpush.bf16.msra.mxu0 %v1189
        %1201 = vmatpush.bf16.msra.mxu0 %v1188
        %1202 = vmatpush.bf16.msra.mxu0 %v1187
        %1203 = vmatpush.bf16.msra.mxu0 %v1186
        %1204 = vmatpush.bf16.msra.mxu0 %v1185
        %1205 = vmatpush.bf16.msra.mxu0 %v1184
        %1206 = vmatpush.bf16.msra.mxu0 %v1183
        %1207 = vmatmul.bf16.gmra.mxu0 %v385
        %v1208 = vpop.f32.mrf.mxu0
        %v1209 = vadd.f32 0.0, %v1208
        %v1210 = vpop.f32.mrf.mxu0
        %v1211 = vadd.f32 0.0, %v1210
        %1212 = vdwg.mxu0
        %v1229 = vunpack.c.l.b16 %v947
        %v1230 = vunpack.c.l.b16 %v948
        %v1231 = vunpack.c.l.b16 %v949
        %v1232 = vunpack.c.l.b16 %v950
        %v1233 = vunpack.c.l.b16 %v951
        %v1234 = vunpack.c.l.b16 %v952
        %v1235 = vunpack.c.l.b16 %v953
        %v1236 = vunpack.c.l.b16 %v954
        %v1237 = vunpack.c.l.b16 %v955
        %v1238 = vunpack.c.l.b16 %v956
        %v1239 = vunpack.c.l.b16 %v957
        %v1240 = vunpack.c.l.b16 %v958
        %v1241 = vunpack.c.l.b16 %v959
        %v1242 = vunpack.c.l.b16 %v960
        %v1243 = vunpack.c.l.b16 %v961
        %v1244 = vunpack.c.l.b16 %v962
        %v1245 = vpack.c.b16 %v1230, %v1229
        %v1246 = vpack.c.b16 %v1232, %v1231
        %v1247 = vpack.c.b16 %v1234, %v1233
        %v1248 = vpack.c.b16 %v1236, %v1235
        %v1249 = vpack.c.b16 %v1238, %v1237
        %v1250 = vpack.c.b16 %v1240, %v1239
        %v1251 = vpack.c.b16 %v1242, %v1241
        %v1252 = vpack.c.b16 %v1244, %v1243
        %1261 = vmatpush.bf16.msra.mxu0 %v1252
        %1262 = vmatpush.bf16.msra.mxu0 %v1251
        %1263 = vmatpush.bf16.msra.mxu0 %v1250
        %1264 = vmatpush.bf16.msra.mxu0 %v1249
        %1265 = vmatpush.bf16.msra.mxu0 %v1248
        %1266 = vmatpush.bf16.msra.mxu0 %v1247
        %1267 = vmatpush.bf16.msra.mxu0 %v1246
        %1268 = vmatpush.bf16.msra.mxu0 %v1245
        %1269 = vmatmul.bf16.gmra.mxu0 %v385
        %v1270 = vpop.f32.mrf.mxu0
        %v1271 = vadd.f32 0.0, %v1270
        %v1272 = vpop.f32.mrf.mxu0
        %v1273 = vadd.f32 0.0, %v1272
        %1274 = vdwg.mxu0
        %v1291 = vunpack.c.l.b16 %v963
        %v1292 = vunpack.c.l.b16 %v964
        %v1293 = vunpack.c.l.b16 %v965
        %v1294 = vunpack.c.l.b16 %v966
        %v1295 = vunpack.c.l.b16 %v967
        %v1296 = vunpack.c.l.b16 %v968
        %v1297 = vunpack.c.l.b16 %v969
        %v1298 = vunpack.c.l.b16 %v970
        %v1299 = vunpack.c.l.b16 %v971
        %v1300 = vunpack.c.l.b16 %v972
        %v1301 = vunpack.c.l.b16 %v973
        %v1302 = vunpack.c.l.b16 %v974
        %v1303 = vunpack.c.l.b16 %v975
        %v1304 = vunpack.c.l.b16 %v976
        %v1305 = vunpack.c.l.b16 %v977
        %v1306 = vunpack.c.l.b16 %v978
        %v1307 = vpack.c.b16 %v1292, %v1291
        %v1308 = vpack.c.b16 %v1294, %v1293
        %v1309 = vpack.c.b16 %v1296, %v1295
        %v1310 = vpack.c.b16 %v1298, %v1297
        %v1311 = vpack.c.b16 %v1300, %v1299
        %v1312 = vpack.c.b16 %v1302, %v1301
        %v1313 = vpack.c.b16 %v1304, %v1303
        %v1314 = vpack.c.b16 %v1306, %v1305
        %1323 = vmatpush.bf16.msra.mxu0 %v1314
        %1324 = vmatpush.bf16.msra.mxu0 %v1313
        %1325 = vmatpush.bf16.msra.mxu0 %v1312
        %1326 = vmatpush.bf16.msra.mxu0 %v1311
        %1327 = vmatpush.bf16.msra.mxu0 %v1310
        %1328 = vmatpush.bf16.msra.mxu0 %v1309
        %1329 = vmatpush.bf16.msra.mxu0 %v1308
        %1330 = vmatpush.bf16.msra.mxu0 %v1307
        %1331 = vmatmul.bf16.gmra.mxu0 %v385
        %v1332 = vpop.f32.mrf.mxu0
        %v1333 = vadd.f32 0.0, %v1332
        %v1334 = vpop.f32.mrf.mxu0
        %v1335 = vadd.f32 0.0, %v1334
        %1336 = vdwg.mxu0
        %v1353 = vunpack.c.l.b16 %v979
        %v1354 = vunpack.c.l.b16 %v980
        %v1355 = vunpack.c.l.b16 %v981
        %v1356 = vunpack.c.l.b16 %v982
        %v1357 = vunpack.c.l.b16 %v983
        %v1358 = vunpack.c.l.b16 %v984
        %v1359 = vunpack.c.l.b16 %v985
        %v1360 = vunpack.c.l.b16 %v986
        %v1361 = vunpack.c.l.b16 %v987
        %v1362 = vunpack.c.l.b16 %v988
        %v1363 = vunpack.c.l.b16 %v989
        %v1364 = vunpack.c.l.b16 %v990
        %v1365 = vunpack.c.l.b16 %v991
        %v1366 = vunpack.c.l.b16 %v992
        %v1367 = vunpack.c.l.b16 %v993
        %v1368 = vunpack.c.l.b16 %v994
        %v1369 = vpack.c.b16 %v1354, %v1353
        %v1370 = vpack.c.b16 %v1356, %v1355
        %v1371 = vpack.c.b16 %v1358, %v1357
        %v1372 = vpack.c.b16 %v1360, %v1359
        %v1373 = vpack.c.b16 %v1362, %v1361
        %v1374 = vpack.c.b16 %v1364, %v1363
        %v1375 = vpack.c.b16 %v1366, %v1365
        %v1376 = vpack.c.b16 %v1368, %v1367
        %1385 = vmatpush.bf16.msra.mxu0 %v1376
        %1386 = vmatpush.bf16.msra.mxu0 %v1375
        %1387 = vmatpush.bf16.msra.mxu0 %v1374
        %1388 = vmatpush.bf16.msra.mxu0 %v1373
        %1389 = vmatpush.bf16.msra.mxu0 %v1372
        %1390 = vmatpush.bf16.msra.mxu0 %v1371
        %1391 = vmatpush.bf16.msra.mxu0 %v1370
        %1392 = vmatpush.bf16.msra.mxu0 %v1369
        %1393 = vmatmul.bf16.gmra.mxu0 %v385
        %v1394 = vpop.f32.mrf.mxu0
        %v1395 = vadd.f32 0.0, %v1394
        %v1396 = vpop.f32.mrf.mxu0
        %v1397 = vadd.f32 0.0, %v1396
        %1398 = vdwg.mxu0
        %v1415 = vunpack.c.l.b16 %v995
        %v1416 = vunpack.c.l.b16 %v996
        %v1417 = vunpack.c.l.b16 %v997
        %v1418 = vunpack.c.l.b16 %v998
        %v1419 = vunpack.c.l.b16 %v999
        %v1420 = vunpack.c.l.b16 %v1000
        %v1421 = vunpack.c.l.b16 %v1001
        %v1422 = vunpack.c.l.b16 %v1002
        %v1423 = vunpack.c.l.b16 %v1003
        %v1424 = vunpack.c.l.b16 %v1004
        %v1425 = vunpack.c.l.b16 %v1005
        %v1426 = vunpack.c.l.b16 %v1006
        %v1427 = vunpack.c.l.b16 %v1007
        %v1428 = vunpack.c.l.b16 %v1008
        %v1429 = vunpack.c.l.b16 %v1009
        %v1430 = vunpack.c.l.b16 %v1010
        %v1431 = vpack.c.b16 %v1416, %v1415
        %v1432 = vpack.c.b16 %v1418, %v1417
        %v1433 = vpack.c.b16 %v1420, %v1419
        %v1434 = vpack.c.b16 %v1422, %v1421
        %v1435 = vpack.c.b16 %v1424, %v1423
        %v1436 = vpack.c.b16 %v1426, %v1425
        %v1437 = vpack.c.b16 %v1428, %v1427
        %v1438 = vpack.c.b16 %v1430, %v1429
        %1447 = vmatpush.bf16.msra.mxu0 %v1438
        %1448 = vmatpush.bf16.msra.mxu0 %v1437
        %1449 = vmatpush.bf16.msra.mxu0 %v1436
        %1450 = vmatpush.bf16.msra.mxu0 %v1435
        %1451 = vmatpush.bf16.msra.mxu0 %v1434
        %1452 = vmatpush.bf16.msra.mxu0 %v1433
        %1453 = vmatpush.bf16.msra.mxu0 %v1432
        %1454 = vmatpush.bf16.msra.mxu0 %v1431
        %1455 = vmatmul.bf16.gmra.mxu0 %v385
        %v1456 = vpop.f32.mrf.mxu0
        %v1457 = vadd.f32 0.0, %v1456
        %v1458 = vpop.f32.mrf.mxu0
        %v1459 = vadd.f32 0.0, %v1458
        %1460 = vdwg.mxu0
        %v1477 = vunpack.c.l.b16 %v1011
        %v1478 = vunpack.c.l.b16 %v1012
        %v1479 = vunpack.c.l.b16 %v1013
        %v1480 = vunpack.c.l.b16 %v1014
        %v1481 = vunpack.c.l.b16 %v1015
        %v1482 = vunpack.c.l.b16 %v1016
        %v1483 = vunpack.c.l.b16 %v1017
        %v1484 = vunpack.c.l.b16 %v1018
        %v1485 = vunpack.c.l.b16 %v1019
        %v1486 = vunpack.c.l.b16 %v1020
        %v1487 = vunpack.c.l.b16 %v1021
        %v1488 = vunpack.c.l.b16 %v1022
        %v1489 = vunpack.c.l.b16 %v1023
        %v1490 = vunpack.c.l.b16 %v1024
        %v1491 = vunpack.c.l.b16 %v1025
        %v1492 = vunpack.c.l.b16 %v1026
        %v1493 = vpack.c.b16 %v1478, %v1477
        %v1494 = vpack.c.b16 %v1480, %v1479
        %v1495 = vpack.c.b16 %v1482, %v1481
        %v1496 = vpack.c.b16 %v1484, %v1483
        %v1497 = vpack.c.b16 %v1486, %v1485
        %v1498 = vpack.c.b16 %v1488, %v1487
        %v1499 = vpack.c.b16 %v1490, %v1489
        %v1500 = vpack.c.b16 %v1492, %v1491
        %1509 = vmatpush.bf16.msra.mxu0 %v1500
        %1510 = vmatpush.bf16.msra.mxu0 %v1499
        %1511 = vmatpush.bf16.msra.mxu0 %v1498
        %1512 = vmatpush.bf16.msra.mxu0 %v1497
        %1513 = vmatpush.bf16.msra.mxu0 %v1496
        %1514 = vmatpush.bf16.msra.mxu0 %v1495
        %1515 = vmatpush.bf16.msra.mxu0 %v1494
        %1516 = vmatpush.bf16.msra.mxu0 %v1493
        %1517 = vmatmul.bf16.gmra.mxu0 %v385
        %v1518 = vpop.f32.mrf.mxu0
        %v1519 = vadd.f32 0.0, %v1518
        %v1520 = vpop.f32.mrf.mxu0
        %v1521 = vadd.f32 0.0, %v1520
        %1522 = vdwg.mxu0
        %v1523 = vpack.c.bf16 %v1085, %v1085
        %v1524 = vpack.c.bf16 %v1087, %v1087
        %v1525 = vpack.c.bf16 %v1147, %v1147
        %v1526 = vpack.c.bf16 %v1149, %v1149
        %v1527 = vpack.c.bf16 %v1209, %v1209
        %v1528 = vpack.c.bf16 %v1211, %v1211
        %v1529 = vpack.c.bf16 %v1271, %v1271
        %v1530 = vpack.c.bf16 %v1273, %v1273
        %v1531 = vpack.c.bf16 %v1333, %v1333
        %v1532 = vpack.c.bf16 %v1335, %v1335
        %v1533 = vpack.c.bf16 %v1395, %v1395
        %v1534 = vpack.c.bf16 %v1397, %v1397
        %v1535 = vpack.c.bf16 %v1457, %v1457
        %v1536 = vpack.c.bf16 %v1459, %v1459
        %v1537 = vpack.c.bf16 %v1519, %v1519
        %v1538 = vpack.c.bf16 %v1521, %v1521
        %v1539 = vld [vmem:[%s3] sm:$0xf]
        %v1540 = vld [vmem:[%s3 + $0x4] sm:$0xf]
        %v1541 = vld [vmem:[%s3 + $0x8] sm:$0xf]
        %v1542 = vld [vmem:[%s3 + $0xc] sm:$0xf]
        %v1543 = vld [vmem:[%s3 + $0x10] sm:$0xf]
        %v1544 = vld [vmem:[%s3 + $0x14] sm:$0xf]
        %v1545 = vld [vmem:[%s3 + $0x18] sm:$0xf]
        %v1546 = vld [vmem:[%s3 + $0x1c] sm:$0xf]
        %v1547 = vld [vmem:[%s3 + $0x20] sm:$0xf]
        %v1548 = vld [vmem:[%s3 + $0x24] sm:$0xf]
        %v1549 = vld [vmem:[%s3 + $0x28] sm:$0xf]
        %v1550 = vld [vmem:[%s3 + $0x2c] sm:$0xf]
        %v1551 = vld [vmem:[%s3 + $0x30] sm:$0xf]
        %v1552 = vld [vmem:[%s3 + $0x34] sm:$0xf]
        %v1553 = vld [vmem:[%s3 + $0x38] sm:$0xf]
        %v1554 = vld [vmem:[%s3 + $0x3c] sm:$0xf]
        %v1555 = vld [vmem:[%s3 + $0x40] sm:$0xf]
        %v1556 = vld [vmem:[%s3 + $0x44] sm:$0xf]
        %v1557 = vld [vmem:[%s3 + $0x48] sm:$0xf]
        %v1558 = vld [vmem:[%s3 + $0x4c] sm:$0xf]
        %v1559 = vld [vmem:[%s3 + $0x50] sm:$0xf]
        %v1560 = vld [vmem:[%s3 + $0x54] sm:$0xf]
        %v1561 = vld [vmem:[%s3 + $0x58] sm:$0xf]
        %v1562 = vld [vmem:[%s3 + $0x5c] sm:$0xf]
        %v1563 = vld [vmem:[%s3 + $0x60] sm:$0xf]
        %v1564 = vld [vmem:[%s3 + $0x64] sm:$0xf]
        %v1565 = vld [vmem:[%s3 + $0x68] sm:$0xf]
        %v1566 = vld [vmem:[%s3 + $0x6c] sm:$0xf]
        %v1567 = vld [vmem:[%s3 + $0x70] sm:$0xf]
        %v1568 = vld [vmem:[%s3 + $0x74] sm:$0xf]
        %v1569 = vld [vmem:[%s3 + $0x78] sm:$0xf]
        %v1570 = vld [vmem:[%s3 + $0x7c] sm:$0xf]
        %v1571 = vld [vmem:[%s3 + $0x80] sm:$0xf]
        %v1572 = vld [vmem:[%s3 + $0x84] sm:$0xf]
        %v1573 = vld [vmem:[%s3 + $0x88] sm:$0xf]
        %v1574 = vld [vmem:[%s3 + $0x8c] sm:$0xf]
        %v1575 = vld [vmem:[%s3 + $0x90] sm:$0xf]
        %v1576 = vld [vmem:[%s3 + $0x94] sm:$0xf]
        %v1577 = vld [vmem:[%s3 + $0x98] sm:$0xf]
        %v1578 = vld [vmem:[%s3 + $0x9c] sm:$0xf]
        %v1579 = vld [vmem:[%s3 + $0xa0] sm:$0xf]
        %v1580 = vld [vmem:[%s3 + $0xa4] sm:$0xf]
        %v1581 = vld [vmem:[%s3 + $0xa8] sm:$0xf]
        %v1582 = vld [vmem:[%s3 + $0xac] sm:$0xf]
        %v1583 = vld [vmem:[%s3 + $0xb0] sm:$0xf]
        %v1584 = vld [vmem:[%s3 + $0xb4] sm:$0xf]
        %v1585 = vld [vmem:[%s3 + $0xb8] sm:$0xf]
        %v1586 = vld [vmem:[%s3 + $0xbc] sm:$0xf]
        %v1587 = vld [vmem:[%s3 + $0xc0] sm:$0xf]
        %v1588 = vld [vmem:[%s3 + $0xc4] sm:$0xf]
        %v1589 = vld [vmem:[%s3 + $0xc8] sm:$0xf]
        %v1590 = vld [vmem:[%s3 + $0xcc] sm:$0xf]
        %v1591 = vld [vmem:[%s3 + $0xd0] sm:$0xf]
        %v1592 = vld [vmem:[%s3 + $0xd4] sm:$0xf]
        %v1593 = vld [vmem:[%s3 + $0xd8] sm:$0xf]
        %v1594 = vld [vmem:[%s3 + $0xdc] sm:$0xf]
        %v1595 = vld [vmem:[%s3 + $0xe0] sm:$0xf]
        %v1596 = vld [vmem:[%s3 + $0xe4] sm:$0xf]
        %v1597 = vld [vmem:[%s3 + $0xe8] sm:$0xf]
        %v1598 = vld [vmem:[%s3 + $0xec] sm:$0xf]
        %v1599 = vld [vmem:[%s3 + $0xf0] sm:$0xf]
        %v1600 = vld [vmem:[%s3 + $0xf4] sm:$0xf]
        %v1601 = vld [vmem:[%s3 + $0xf8] sm:$0xf]
        %v1602 = vld [vmem:[%s3 + $0xfc] sm:$0xf]
        %v1603 = vld [vmem:[%s3 + $0x100] sm:$0xf]
        %v1604 = vld [vmem:[%s3 + $0x104] sm:$0xf]
        %v1605 = vld [vmem:[%s3 + $0x108] sm:$0xf]
        %v1606 = vld [vmem:[%s3 + $0x10c] sm:$0xf]
        %v1607 = vld [vmem:[%s3 + $0x110] sm:$0xf]
        %v1608 = vld [vmem:[%s3 + $0x114] sm:$0xf]
        %v1609 = vld [vmem:[%s3 + $0x118] sm:$0xf]
        %v1610 = vld [vmem:[%s3 + $0x11c] sm:$0xf]
        %v1611 = vld [vmem:[%s3 + $0x120] sm:$0xf]
        %v1612 = vld [vmem:[%s3 + $0x124] sm:$0xf]
        %v1613 = vld [vmem:[%s3 + $0x128] sm:$0xf]
        %v1614 = vld [vmem:[%s3 + $0x12c] sm:$0xf]
        %v1615 = vld [vmem:[%s3 + $0x130] sm:$0xf]
        %v1616 = vld [vmem:[%s3 + $0x134] sm:$0xf]
        %v1617 = vld [vmem:[%s3 + $0x138] sm:$0xf]
        %v1618 = vld [vmem:[%s3 + $0x13c] sm:$0xf]
        %v1619 = vld [vmem:[%s3 + $0x140] sm:$0xf]
        %v1620 = vld [vmem:[%s3 + $0x144] sm:$0xf]
        %v1621 = vld [vmem:[%s3 + $0x148] sm:$0xf]
        %v1622 = vld [vmem:[%s3 + $0x14c] sm:$0xf]
        %v1623 = vld [vmem:[%s3 + $0x150] sm:$0xf]
        %v1624 = vld [vmem:[%s3 + $0x154] sm:$0xf]
        %v1625 = vld [vmem:[%s3 + $0x158] sm:$0xf]
        %v1626 = vld [vmem:[%s3 + $0x15c] sm:$0xf]
        %v1627 = vld [vmem:[%s3 + $0x160] sm:$0xf]
        %v1628 = vld [vmem:[%s3 + $0x164] sm:$0xf]
        %v1629 = vld [vmem:[%s3 + $0x168] sm:$0xf]
        %v1630 = vld [vmem:[%s3 + $0x16c] sm:$0xf]
        %v1631 = vld [vmem:[%s3 + $0x170] sm:$0xf]
        %v1632 = vld [vmem:[%s3 + $0x174] sm:$0xf]
        %v1633 = vld [vmem:[%s3 + $0x178] sm:$0xf]
        %v1634 = vld [vmem:[%s3 + $0x17c] sm:$0xf]
        %v1635 = vld [vmem:[%s3 + $0x180] sm:$0xf]
        %v1636 = vld [vmem:[%s3 + $0x184] sm:$0xf]
        %v1637 = vld [vmem:[%s3 + $0x188] sm:$0xf]
        %v1638 = vld [vmem:[%s3 + $0x18c] sm:$0xf]
        %v1639 = vld [vmem:[%s3 + $0x190] sm:$0xf]
        %v1640 = vld [vmem:[%s3 + $0x194] sm:$0xf]
        %v1641 = vld [vmem:[%s3 + $0x198] sm:$0xf]
        %v1642 = vld [vmem:[%s3 + $0x19c] sm:$0xf]
        %v1643 = vld [vmem:[%s3 + $0x1a0] sm:$0xf]
        %v1644 = vld [vmem:[%s3 + $0x1a4] sm:$0xf]
        %v1645 = vld [vmem:[%s3 + $0x1a8] sm:$0xf]
        %v1646 = vld [vmem:[%s3 + $0x1ac] sm:$0xf]
        %v1647 = vld [vmem:[%s3 + $0x1b0] sm:$0xf]
        %v1648 = vld [vmem:[%s3 + $0x1b4] sm:$0xf]
        %v1649 = vld [vmem:[%s3 + $0x1b8] sm:$0xf]
        %v1650 = vld [vmem:[%s3 + $0x1bc] sm:$0xf]
        %v1651 = vld [vmem:[%s3 + $0x1c0] sm:$0xf]
        %v1652 = vld [vmem:[%s3 + $0x1c4] sm:$0xf]
        %v1653 = vld [vmem:[%s3 + $0x1c8] sm:$0xf]
        %v1654 = vld [vmem:[%s3 + $0x1cc] sm:$0xf]
        %v1655 = vld [vmem:[%s3 + $0x1d0] sm:$0xf]
        %v1656 = vld [vmem:[%s3 + $0x1d4] sm:$0xf]
        %v1657 = vld [vmem:[%s3 + $0x1d8] sm:$0xf]
        %v1658 = vld [vmem:[%s3 + $0x1dc] sm:$0xf]
        %v1659 = vld [vmem:[%s3 + $0x1e0] sm:$0xf]
        %v1660 = vld [vmem:[%s3 + $0x1e4] sm:$0xf]
        %v1661 = vld [vmem:[%s3 + $0x1e8] sm:$0xf]
        %v1662 = vld [vmem:[%s3 + $0x1ec] sm:$0xf]
        %v1663 = vld [vmem:[%s3 + $0x1f0] sm:$0xf]
        %v1664 = vld [vmem:[%s3 + $0x1f4] sm:$0xf]
        %v1665 = vld [vmem:[%s3 + $0x1f8] sm:$0xf]
        %v1666 = vld [vmem:[%s3 + $0x1fc] sm:$0xf]
        %v1683 = vunpack.c.l.b16 %v1539
        %v1684 = vunpack.c.l.b16 %v1540
        %v1685 = vunpack.c.l.b16 %v1541
        %v1686 = vunpack.c.l.b16 %v1542
        %v1687 = vunpack.c.l.b16 %v1543
        %v1688 = vunpack.c.l.b16 %v1544
        %v1689 = vunpack.c.l.b16 %v1545
        %v1690 = vunpack.c.l.b16 %v1546
        %v1691 = vunpack.c.l.b16 %v1547
        %v1692 = vunpack.c.l.b16 %v1548
        %v1693 = vunpack.c.l.b16 %v1549
        %v1694 = vunpack.c.l.b16 %v1550
        %v1695 = vunpack.c.l.b16 %v1551
        %v1696 = vunpack.c.l.b16 %v1552
        %v1697 = vunpack.c.l.b16 %v1553
        %v1698 = vunpack.c.l.b16 %v1554
        %v1699 = vpack.c.b16 %v1684, %v1683
        %v1700 = vpack.c.b16 %v1686, %v1685
        %v1701 = vpack.c.b16 %v1688, %v1687
        %v1702 = vpack.c.b16 %v1690, %v1689
        %v1703 = vpack.c.b16 %v1692, %v1691
        %v1704 = vpack.c.b16 %v1694, %v1693
        %v1705 = vpack.c.b16 %v1696, %v1695
        %v1706 = vpack.c.b16 %v1698, %v1697
        %1715 = vmatpush.bf16.msra.mxu0 %v1706
        %1716 = vmatpush.bf16.msra.mxu0 %v1705
        %1717 = vmatpush.bf16.msra.mxu0 %v1704
        %1718 = vmatpush.bf16.msra.mxu0 %v1703
        %1719 = vmatpush.bf16.msra.mxu0 %v1702
        %1720 = vmatpush.bf16.msra.mxu0 %v1701
        %1721 = vmatpush.bf16.msra.mxu0 %v1700
        %1722 = vmatpush.bf16.msra.mxu0 %v1699
        %1723 = vmatmul.bf16.gmra.mxu0 %v385
        %v1724 = vpop.f32.mrf.mxu0
        %v1725 = vadd.f32 0.0, %v1724
        %v1726 = vpop.f32.mrf.mxu0
        %v1727 = vadd.f32 0.0, %v1726
        %1728 = vdwg.mxu0
        %v1745 = vunpack.c.l.b16 %v1555
        %v1746 = vunpack.c.l.b16 %v1556
        %v1747 = vunpack.c.l.b16 %v1557
        %v1748 = vunpack.c.l.b16 %v1558
        %v1749 = vunpack.c.l.b16 %v1559
        %v1750 = vunpack.c.l.b16 %v1560
        %v1751 = vunpack.c.l.b16 %v1561
        %v1752 = vunpack.c.l.b16 %v1562
        %v1753 = vunpack.c.l.b16 %v1563
        %v1754 = vunpack.c.l.b16 %v1564
        %v1755 = vunpack.c.l.b16 %v1565
        %v1756 = vunpack.c.l.b16 %v1566
        %v1757 = vunpack.c.l.b16 %v1567
        %v1758 = vunpack.c.l.b16 %v1568
        %v1759 = vunpack.c.l.b16 %v1569
        %v1760 = vunpack.c.l.b16 %v1570
        %v1761 = vpack.c.b16 %v1746, %v1745
        %v1762 = vpack.c.b16 %v1748, %v1747
        %v1763 = vpack.c.b16 %v1750, %v1749
        %v1764 = vpack.c.b16 %v1752, %v1751
        %v1765 = vpack.c.b16 %v1754, %v1753
        %v1766 = vpack.c.b16 %v1756, %v1755
        %v1767 = vpack.c.b16 %v1758, %v1757
        %v1768 = vpack.c.b16 %v1760, %v1759
        %1777 = vmatpush.bf16.msra.mxu0 %v1768
        %1778 = vmatpush.bf16.msra.mxu0 %v1767
        %1779 = vmatpush.bf16.msra.mxu0 %v1766
        %1780 = vmatpush.bf16.msra.mxu0 %v1765
        %1781 = vmatpush.bf16.msra.mxu0 %v1764
        %1782 = vmatpush.bf16.msra.mxu0 %v1763
        %1783 = vmatpush.bf16.msra.mxu0 %v1762
        %1784 = vmatpush.bf16.msra.mxu0 %v1761
        %1785 = vmatmul.bf16.gmra.mxu0 %v385
        %v1786 = vpop.f32.mrf.mxu0
        %v1787 = vadd.f32 0.0, %v1786
        %v1788 = vpop.f32.mrf.mxu0
        %v1789 = vadd.f32 0.0, %v1788
        %1790 = vdwg.mxu0
        %v1807 = vunpack.c.l.b16 %v1571
        %v1808 = vunpack.c.l.b16 %v1572
        %v1809 = vunpack.c.l.b16 %v1573
        %v1810 = vunpack.c.l.b16 %v1574
        %v1811 = vunpack.c.l.b16 %v1575
        %v1812 = vunpack.c.l.b16 %v1576
        %v1813 = vunpack.c.l.b16 %v1577
        %v1814 = vunpack.c.l.b16 %v1578
        %v1815 = vunpack.c.l.b16 %v1579
        %v1816 = vunpack.c.l.b16 %v1580
        %v1817 = vunpack.c.l.b16 %v1581
        %v1818 = vunpack.c.l.b16 %v1582
        %v1819 = vunpack.c.l.b16 %v1583
        %v1820 = vunpack.c.l.b16 %v1584
        %v1821 = vunpack.c.l.b16 %v1585
        %v1822 = vunpack.c.l.b16 %v1586
        %v1823 = vpack.c.b16 %v1808, %v1807
        %v1824 = vpack.c.b16 %v1810, %v1809
        %v1825 = vpack.c.b16 %v1812, %v1811
        %v1826 = vpack.c.b16 %v1814, %v1813
        %v1827 = vpack.c.b16 %v1816, %v1815
        %v1828 = vpack.c.b16 %v1818, %v1817
        %v1829 = vpack.c.b16 %v1820, %v1819
        %v1830 = vpack.c.b16 %v1822, %v1821
        %1839 = vmatpush.bf16.msra.mxu0 %v1830
        %1840 = vmatpush.bf16.msra.mxu0 %v1829
        %1841 = vmatpush.bf16.msra.mxu0 %v1828
        %1842 = vmatpush.bf16.msra.mxu0 %v1827
        %1843 = vmatpush.bf16.msra.mxu0 %v1826
        %1844 = vmatpush.bf16.msra.mxu0 %v1825
        %1845 = vmatpush.bf16.msra.mxu0 %v1824
        %1846 = vmatpush.bf16.msra.mxu0 %v1823
        %1847 = vmatmul.bf16.gmra.mxu0 %v385
        %v1848 = vpop.f32.mrf.mxu0
        %v1849 = vadd.f32 0.0, %v1848
        %v1850 = vpop.f32.mrf.mxu0
        %v1851 = vadd.f32 0.0, %v1850
        %1852 = vdwg.mxu0
        %v1869 = vunpack.c.l.b16 %v1587
        %v1870 = vunpack.c.l.b16 %v1588
        %v1871 = vunpack.c.l.b16 %v1589
        %v1872 = vunpack.c.l.b16 %v1590
        %v1873 = vunpack.c.l.b16 %v1591
        %v1874 = vunpack.c.l.b16 %v1592
        %v1875 = vunpack.c.l.b16 %v1593
        %v1876 = vunpack.c.l.b16 %v1594
        %v1877 = vunpack.c.l.b16 %v1595
        %v1878 = vunpack.c.l.b16 %v1596
        %v1879 = vunpack.c.l.b16 %v1597
        %v1880 = vunpack.c.l.b16 %v1598
        %v1881 = vunpack.c.l.b16 %v1599
        %v1882 = vunpack.c.l.b16 %v1600
        %v1883 = vunpack.c.l.b16 %v1601
        %v1884 = vunpack.c.l.b16 %v1602
        %v1885 = vpack.c.b16 %v1870, %v1869
        %v1886 = vpack.c.b16 %v1872, %v1871
        %v1887 = vpack.c.b16 %v1874, %v1873
        %v1888 = vpack.c.b16 %v1876, %v1875
        %v1889 = vpack.c.b16 %v1878, %v1877
        %v1890 = vpack.c.b16 %v1880, %v1879
        %v1891 = vpack.c.b16 %v1882, %v1881
        %v1892 = vpack.c.b16 %v1884, %v1883
        %1901 = vmatpush.bf16.msra.mxu0 %v1892
        %1902 = vmatpush.bf16.msra.mxu0 %v1891
        %1903 = vmatpush.bf16.msra.mxu0 %v1890
        %1904 = vmatpush.bf16.msra.mxu0 %v1889
        %1905 = vmatpush.bf16.msra.mxu0 %v1888
        %1906 = vmatpush.bf16.msra.mxu0 %v1887
        %1907 = vmatpush.bf16.msra.mxu0 %v1886
        %1908 = vmatpush.bf16.msra.mxu0 %v1885
        %1909 = vmatmul.bf16.gmra.mxu0 %v385
        %v1910 = vpop.f32.mrf.mxu0
        %v1911 = vadd.f32 0.0, %v1910
        %v1912 = vpop.f32.mrf.mxu0
        %v1913 = vadd.f32 0.0, %v1912
        %1914 = vdwg.mxu0
        %v1931 = vunpack.c.l.b16 %v1603
        %v1932 = vunpack.c.l.b16 %v1604
        %v1933 = vunpack.c.l.b16 %v1605
        %v1934 = vunpack.c.l.b16 %v1606
        %v1935 = vunpack.c.l.b16 %v1607
        %v1936 = vunpack.c.l.b16 %v1608
        %v1937 = vunpack.c.l.b16 %v1609
        %v1938 = vunpack.c.l.b16 %v1610
        %v1939 = vunpack.c.l.b16 %v1611
        %v1940 = vunpack.c.l.b16 %v1612
        %v1941 = vunpack.c.l.b16 %v1613
        %v1942 = vunpack.c.l.b16 %v1614
        %v1943 = vunpack.c.l.b16 %v1615
        %v1944 = vunpack.c.l.b16 %v1616
        %v1945 = vunpack.c.l.b16 %v1617
        %v1946 = vunpack.c.l.b16 %v1618
        %v1947 = vpack.c.b16 %v1932, %v1931
        %v1948 = vpack.c.b16 %v1934, %v1933
        %v1949 = vpack.c.b16 %v1936, %v1935
        %v1950 = vpack.c.b16 %v1938, %v1937
        %v1951 = vpack.c.b16 %v1940, %v1939
        %v1952 = vpack.c.b16 %v1942, %v1941
        %v1953 = vpack.c.b16 %v1944, %v1943
        %v1954 = vpack.c.b16 %v1946, %v1945
        %1963 = vmatpush.bf16.msra.mxu0 %v1954
        %1964 = vmatpush.bf16.msra.mxu0 %v1953
        %1965 = vmatpush.bf16.msra.mxu0 %v1952
        %1966 = vmatpush.bf16.msra.mxu0 %v1951
        %1967 = vmatpush.bf16.msra.mxu0 %v1950
        %1968 = vmatpush.bf16.msra.mxu0 %v1949
        %1969 = vmatpush.bf16.msra.mxu0 %v1948
        %1970 = vmatpush.bf16.msra.mxu0 %v1947
        %1971 = vmatmul.bf16.gmra.mxu0 %v385
        %v1972 = vpop.f32.mrf.mxu0
        %v1973 = vadd.f32 0.0, %v1972
        %v1974 = vpop.f32.mrf.mxu0
        %v1975 = vadd.f32 0.0, %v1974
        %1976 = vdwg.mxu0
        %v1993 = vunpack.c.l.b16 %v1619
        %v1994 = vunpack.c.l.b16 %v1620
        %v1995 = vunpack.c.l.b16 %v1621
        %v1996 = vunpack.c.l.b16 %v1622
        %v1997 = vunpack.c.l.b16 %v1623
        %v1998 = vunpack.c.l.b16 %v1624
        %v1999 = vunpack.c.l.b16 %v1625
        %v2000 = vunpack.c.l.b16 %v1626
        %v2001 = vunpack.c.l.b16 %v1627
        %v2002 = vunpack.c.l.b16 %v1628
        %v2003 = vunpack.c.l.b16 %v1629
        %v2004 = vunpack.c.l.b16 %v1630
        %v2005 = vunpack.c.l.b16 %v1631
        %v2006 = vunpack.c.l.b16 %v1632
        %v2007 = vunpack.c.l.b16 %v1633
        %v2008 = vunpack.c.l.b16 %v1634
        %v2009 = vpack.c.b16 %v1994, %v1993
        %v2010 = vpack.c.b16 %v1996, %v1995
        %v2011 = vpack.c.b16 %v1998, %v1997
        %v2012 = vpack.c.b16 %v2000, %v1999
        %v2013 = vpack.c.b16 %v2002, %v2001
        %v2014 = vpack.c.b16 %v2004, %v2003
        %v2015 = vpack.c.b16 %v2006, %v2005
        %v2016 = vpack.c.b16 %v2008, %v2007
        %2025 = vmatpush.bf16.msra.mxu0 %v2016
        %2026 = vmatpush.bf16.msra.mxu0 %v2015
        %2027 = vmatpush.bf16.msra.mxu0 %v2014
        %2028 = vmatpush.bf16.msra.mxu0 %v2013
        %2029 = vmatpush.bf16.msra.mxu0 %v2012
        %2030 = vmatpush.bf16.msra.mxu0 %v2011
        %2031 = vmatpush.bf16.msra.mxu0 %v2010
        %2032 = vmatpush.bf16.msra.mxu0 %v2009
        %2033 = vmatmul.bf16.gmra.mxu0 %v385
        %v2034 = vpop.f32.mrf.mxu0
        %v2035 = vadd.f32 0.0, %v2034
        %v2036 = vpop.f32.mrf.mxu0
        %v2037 = vadd.f32 0.0, %v2036
        %2038 = vdwg.mxu0
        %v2055 = vunpack.c.l.b16 %v1635
        %v2056 = vunpack.c.l.b16 %v1636
        %v2057 = vunpack.c.l.b16 %v1637
        %v2058 = vunpack.c.l.b16 %v1638
        %v2059 = vunpack.c.l.b16 %v1639
        %v2060 = vunpack.c.l.b16 %v1640
        %v2061 = vunpack.c.l.b16 %v1641
        %v2062 = vunpack.c.l.b16 %v1642
        %v2063 = vunpack.c.l.b16 %v1643
        %v2064 = vunpack.c.l.b16 %v1644
        %v2065 = vunpack.c.l.b16 %v1645
        %v2066 = vunpack.c.l.b16 %v1646
        %v2067 = vunpack.c.l.b16 %v1647
        %v2068 = vunpack.c.l.b16 %v1648
        %v2069 = vunpack.c.l.b16 %v1649
        %v2070 = vunpack.c.l.b16 %v1650
        %v2071 = vpack.c.b16 %v2056, %v2055
        %v2072 = vpack.c.b16 %v2058, %v2057
        %v2073 = vpack.c.b16 %v2060, %v2059
        %v2074 = vpack.c.b16 %v2062, %v2061
        %v2075 = vpack.c.b16 %v2064, %v2063
        %v2076 = vpack.c.b16 %v2066, %v2065
        %v2077 = vpack.c.b16 %v2068, %v2067
        %v2078 = vpack.c.b16 %v2070, %v2069
        %2087 = vmatpush.bf16.msra.mxu0 %v2078
        %2088 = vmatpush.bf16.msra.mxu0 %v2077
        %2089 = vmatpush.bf16.msra.mxu0 %v2076
        %2090 = vmatpush.bf16.msra.mxu0 %v2075
        %2091 = vmatpush.bf16.msra.mxu0 %v2074
        %2092 = vmatpush.bf16.msra.mxu0 %v2073
        %2093 = vmatpush.bf16.msra.mxu0 %v2072
        %2094 = vmatpush.bf16.msra.mxu0 %v2071
        %2095 = vmatmul.bf16.gmra.mxu0 %v385
        %v2096 = vpop.f32.mrf.mxu0
        %v2097 = vadd.f32 0.0, %v2096
        %v2098 = vpop.f32.mrf.mxu0
        %v2099 = vadd.f32 0.0, %v2098
        %2100 = vdwg.mxu0
        %v2117 = vunpack.c.l.b16 %v1651
        %v2118 = vunpack.c.l.b16 %v1652
        %v2119 = vunpack.c.l.b16 %v1653
        %v2120 = vunpack.c.l.b16 %v1654
        %v2121 = vunpack.c.l.b16 %v1655
        %v2122 = vunpack.c.l.b16 %v1656
        %v2123 = vunpack.c.l.b16 %v1657
        %v2124 = vunpack.c.l.b16 %v1658
        %v2125 = vunpack.c.l.b16 %v1659
        %v2126 = vunpack.c.l.b16 %v1660
        %v2127 = vunpack.c.l.b16 %v1661
        %v2128 = vunpack.c.l.b16 %v1662
        %v2129 = vunpack.c.l.b16 %v1663
        %v2130 = vunpack.c.l.b16 %v1664
        %v2131 = vunpack.c.l.b16 %v1665
        %v2132 = vunpack.c.l.b16 %v1666
        %v2133 = vpack.c.b16 %v2118, %v2117
        %v2134 = vpack.c.b16 %v2120, %v2119
        %v2135 = vpack.c.b16 %v2122, %v2121
        %v2136 = vpack.c.b16 %v2124, %v2123
        %v2137 = vpack.c.b16 %v2126, %v2125
        %v2138 = vpack.c.b16 %v2128, %v2127
        %v2139 = vpack.c.b16 %v2130, %v2129
        %v2140 = vpack.c.b16 %v2132, %v2131
        %2149 = vmatpush.bf16.msra.mxu0 %v2140
        %2150 = vmatpush.bf16.msra.mxu0 %v2139
        %2151 = vmatpush.bf16.msra.mxu0 %v2138
        %2152 = vmatpush.bf16.msra.mxu0 %v2137
        %2153 = vmatpush.bf16.msra.mxu0 %v2136
        %2154 = vmatpush.bf16.msra.mxu0 %v2135
        %2155 = vmatpush.bf16.msra.mxu0 %v2134
        %2156 = vmatpush.bf16.msra.mxu0 %v2133
        %2157 = vmatmul.bf16.gmra.mxu0 %v385
        %v2158 = vpop.f32.mrf.mxu0
        %v2159 = vadd.f32 0.0, %v2158
        %v2160 = vpop.f32.mrf.mxu0
        %v2161 = vadd.f32 0.0, %v2160
        %2162 = vdwg.mxu0
        %v2163 = vpack.c.bf16 %v1725, %v1725
        %v2164 = vpack.c.bf16 %v1727, %v1727
        %v2165 = vpack.c.bf16 %v1787, %v1787
        %v2166 = vpack.c.bf16 %v1789, %v1789
        %v2167 = vpack.c.bf16 %v1849, %v1849
        %v2168 = vpack.c.bf16 %v1851, %v1851
        %v2169 = vpack.c.bf16 %v1911, %v1911
        %v2170 = vpack.c.bf16 %v1913, %v1913
        %v2171 = vpack.c.bf16 %v1973, %v1973
        %v2172 = vpack.c.bf16 %v1975, %v1975
        %v2173 = vpack.c.bf16 %v2035, %v2035
        %v2174 = vpack.c.bf16 %v2037, %v2037
        %v2175 = vpack.c.bf16 %v2097, %v2097
        %v2176 = vpack.c.bf16 %v2099, %v2099
        %v2177 = vpack.c.bf16 %v2159, %v2159
        %v2178 = vpack.c.bf16 %v2161, %v2161
        %v2181 = vunpack.c.l.b16 %v883
        %v2182 = vunpack.c.l.b16 %v884
        %v2183 = vpack.c.b16 %v2182, %v2181
        %v2186 = vunpack.c.l.b16 %v1523
        %v2187 = vunpack.c.l.b16 %v1524
        %v2188 = vpack.c.b16 %v2187, %v2186
        %vm2189 = vcmask 130048
        %v2191 = vsel %vm2189, %v2183, 0
        %v2194 = vsel %vm2189, %v2188, 0
        %2196 = vmatpush.bf16.xpose.msra.mxu0 0
        %2197 = vmatpush.bf16.xpose.msra.mxu0 0
        %2198 = vmatpush.bf16.xpose.msra.mxu0 0
        %2199 = vmatpush.bf16.xpose.msra.mxu0 0
        %2200 = vmatpush.bf16.xpose.msra.mxu0 0
        %2201 = vmatpush.bf16.xpose.msra.mxu0 0
        %2202 = vmatpush.bf16.xpose.msra.mxu0 0
        %2203 = vmatpush.bf16.xpose.msra.mxu0 %v2194
        %2204 = vmatmul.bf16.gmra.mxu0 %v2191
        %v2205 = vpop.f32.mrf.mxu0
        %v2206 = vadd.f32 0.0, %v2205
        %v2207 = vpop.f32.mrf.mxu0
        %v2208 = vadd.f32 0.0, %v2207
        %2209 = vdwg.mxu0
        %v2212 = vunpack.c.l.b16 %v885
        %v2213 = vunpack.c.l.b16 %v886
        %v2214 = vpack.c.b16 %v2213, %v2212
        %v2217 = vunpack.c.l.b16 %v1525
        %v2218 = vunpack.c.l.b16 %v1526
        %v2219 = vpack.c.b16 %v2218, %v2217
        %v2221 = vsel %vm2189, %v2214, 0
        %v2224 = vsel %vm2189, %v2219, 0
        %2226 = vmatpush.bf16.xpose.msra.mxu0 0
        %2227 = vmatpush.bf16.xpose.msra.mxu0 0
        %2228 = vmatpush.bf16.xpose.msra.mxu0 0
        %2229 = vmatpush.bf16.xpose.msra.mxu0 0
        %2230 = vmatpush.bf16.xpose.msra.mxu0 0
        %2231 = vmatpush.bf16.xpose.msra.mxu0 0
        %2232 = vmatpush.bf16.xpose.msra.mxu0 0
        %2233 = vmatpush.bf16.xpose.msra.mxu0 %v2224
        %2234 = vmatmul.bf16.gmra.mxu0 %v2221
        %v2235 = vpop.f32.mrf.mxu0
        %v2236 = vadd.f32 0.0, %v2235
        %v2237 = vpop.f32.mrf.mxu0
        %v2238 = vadd.f32 0.0, %v2237
        %2239 = vdwg.mxu0
        %v2242 = vunpack.c.l.b16 %v887
        %v2243 = vunpack.c.l.b16 %v888
        %v2244 = vpack.c.b16 %v2243, %v2242
        %v2247 = vunpack.c.l.b16 %v1527
        %v2248 = vunpack.c.l.b16 %v1528
        %v2249 = vpack.c.b16 %v2248, %v2247
        %v2251 = vsel %vm2189, %v2244, 0
        %v2254 = vsel %vm2189, %v2249, 0
        %2256 = vmatpush.bf16.xpose.msra.mxu0 0
        %2257 = vmatpush.bf16.xpose.msra.mxu0 0
        %2258 = vmatpush.bf16.xpose.msra.mxu0 0
        %2259 = vmatpush.bf16.xpose.msra.mxu0 0
        %2260 = vmatpush.bf16.xpose.msra.mxu0 0
        %2261 = vmatpush.bf16.xpose.msra.mxu0 0
        %2262 = vmatpush.bf16.xpose.msra.mxu0 0
        %2263 = vmatpush.bf16.xpose.msra.mxu0 %v2254
        %2264 = vmatmul.bf16.gmra.mxu0 %v2251
        %v2265 = vpop.f32.mrf.mxu0
        %v2266 = vadd.f32 0.0, %v2265
        %v2267 = vpop.f32.mrf.mxu0
        %v2268 = vadd.f32 0.0, %v2267
        %2269 = vdwg.mxu0
        %v2272 = vunpack.c.l.b16 %v889
        %v2273 = vunpack.c.l.b16 %v890
        %v2274 = vpack.c.b16 %v2273, %v2272
        %v2277 = vunpack.c.l.b16 %v1529
        %v2278 = vunpack.c.l.b16 %v1530
        %v2279 = vpack.c.b16 %v2278, %v2277
        %v2281 = vsel %vm2189, %v2274, 0
        %v2284 = vsel %vm2189, %v2279, 0
        %2286 = vmatpush.bf16.xpose.msra.mxu0 0
        %2287 = vmatpush.bf16.xpose.msra.mxu0 0
        %2288 = vmatpush.bf16.xpose.msra.mxu0 0
        %2289 = vmatpush.bf16.xpose.msra.mxu0 0
        %2290 = vmatpush.bf16.xpose.msra.mxu0 0
        %2291 = vmatpush.bf16.xpose.msra.mxu0 0
        %2292 = vmatpush.bf16.xpose.msra.mxu0 0
        %2293 = vmatpush.bf16.xpose.msra.mxu0 %v2284
        %2294 = vmatmul.bf16.gmra.mxu0 %v2281
        %v2295 = vpop.f32.mrf.mxu0
        %v2296 = vadd.f32 0.0, %v2295
        %v2297 = vpop.f32.mrf.mxu0
        %v2298 = vadd.f32 0.0, %v2297
        %2299 = vdwg.mxu0
        %v2302 = vunpack.c.l.b16 %v891
        %v2303 = vunpack.c.l.b16 %v892
        %v2304 = vpack.c.b16 %v2303, %v2302
        %v2307 = vunpack.c.l.b16 %v1531
        %v2308 = vunpack.c.l.b16 %v1532
        %v2309 = vpack.c.b16 %v2308, %v2307
        %v2311 = vsel %vm2189, %v2304, 0
        %v2314 = vsel %vm2189, %v2309, 0
        %2316 = vmatpush.bf16.xpose.msra.mxu0 0
        %2317 = vmatpush.bf16.xpose.msra.mxu0 0
        %2318 = vmatpush.bf16.xpose.msra.mxu0 0
        %2319 = vmatpush.bf16.xpose.msra.mxu0 0
        %2320 = vmatpush.bf16.xpose.msra.mxu0 0
        %2321 = vmatpush.bf16.xpose.msra.mxu0 0
        %2322 = vmatpush.bf16.xpose.msra.mxu0 0
        %2323 = vmatpush.bf16.xpose.msra.mxu0 %v2314
        %2324 = vmatmul.bf16.gmra.mxu0 %v2311
        %v2325 = vpop.f32.mrf.mxu0
        %v2326 = vadd.f32 0.0, %v2325
        %v2327 = vpop.f32.mrf.mxu0
        %v2328 = vadd.f32 0.0, %v2327
        %2329 = vdwg.mxu0
        %v2332 = vunpack.c.l.b16 %v893
        %v2333 = vunpack.c.l.b16 %v894
        %v2334 = vpack.c.b16 %v2333, %v2332
        %v2337 = vunpack.c.l.b16 %v1533
        %v2338 = vunpack.c.l.b16 %v1534
        %v2339 = vpack.c.b16 %v2338, %v2337
        %v2341 = vsel %vm2189, %v2334, 0
        %v2344 = vsel %vm2189, %v2339, 0
        %2346 = vmatpush.bf16.xpose.msra.mxu0 0
        %2347 = vmatpush.bf16.xpose.msra.mxu0 0
        %2348 = vmatpush.bf16.xpose.msra.mxu0 0
        %2349 = vmatpush.bf16.xpose.msra.mxu0 0
        %2350 = vmatpush.bf16.xpose.msra.mxu0 0
        %2351 = vmatpush.bf16.xpose.msra.mxu0 0
        %2352 = vmatpush.bf16.xpose.msra.mxu0 0
        %2353 = vmatpush.bf16.xpose.msra.mxu0 %v2344
        %2354 = vmatmul.bf16.gmra.mxu0 %v2341
        %v2355 = vpop.f32.mrf.mxu0
        %v2356 = vadd.f32 0.0, %v2355
        %v2357 = vpop.f32.mrf.mxu0
        %v2358 = vadd.f32 0.0, %v2357
        %2359 = vdwg.mxu0
        %v2362 = vunpack.c.l.b16 %v895
        %v2363 = vunpack.c.l.b16 %v896
        %v2364 = vpack.c.b16 %v2363, %v2362
        %v2367 = vunpack.c.l.b16 %v1535
        %v2368 = vunpack.c.l.b16 %v1536
        %v2369 = vpack.c.b16 %v2368, %v2367
        %v2371 = vsel %vm2189, %v2364, 0
        %v2374 = vsel %vm2189, %v2369, 0
        %2376 = vmatpush.bf16.xpose.msra.mxu0 0
        %2377 = vmatpush.bf16.xpose.msra.mxu0 0
        %2378 = vmatpush.bf16.xpose.msra.mxu0 0
        %2379 = vmatpush.bf16.xpose.msra.mxu0 0
        %2380 = vmatpush.bf16.xpose.msra.mxu0 0
        %2381 = vmatpush.bf16.xpose.msra.mxu0 0
        %2382 = vmatpush.bf16.xpose.msra.mxu0 0
        %2383 = vmatpush.bf16.xpose.msra.mxu0 %v2374
        %2384 = vmatmul.bf16.gmra.mxu0 %v2371
        %v2385 = vpop.f32.mrf.mxu0
        %v2386 = vadd.f32 0.0, %v2385
        %v2387 = vpop.f32.mrf.mxu0
        %v2388 = vadd.f32 0.0, %v2387
        %2389 = vdwg.mxu0
        %v2392 = vunpack.c.l.b16 %v897
        %v2393 = vunpack.c.l.b16 %v898
        %v2394 = vpack.c.b16 %v2393, %v2392
        %v2397 = vunpack.c.l.b16 %v1537
        %v2398 = vunpack.c.l.b16 %v1538
        %v2399 = vpack.c.b16 %v2398, %v2397
        %v2401 = vsel %vm2189, %v2394, 0
        %v2404 = vsel %vm2189, %v2399, 0
        %2406 = vmatpush.bf16.xpose.msra.mxu0 0
        %2407 = vmatpush.bf16.xpose.msra.mxu0 0
        %2408 = vmatpush.bf16.xpose.msra.mxu0 0
        %2409 = vmatpush.bf16.xpose.msra.mxu0 0
        %2410 = vmatpush.bf16.xpose.msra.mxu0 0
        %2411 = vmatpush.bf16.xpose.msra.mxu0 0
        %2412 = vmatpush.bf16.xpose.msra.mxu0 0
        %2413 = vmatpush.bf16.xpose.msra.mxu0 %v2404
        %2414 = vmatmul.bf16.gmra.mxu0 %v2401
        %v2415 = vpop.f32.mrf.mxu0
        %v2416 = vadd.f32 0.0, %v2415
        %v2417 = vpop.f32.mrf.mxu0
        %v2418 = vadd.f32 0.0, %v2417
        %2419 = vdwg.mxu0
        %v2420 = vmul.f32 %v2206, 0.25
        %v2421 = vmul.f32 %v2208, 0.25
        %v2422 = vmul.f32 %v2236, 0.25
        %v2423 = vmul.f32 %v2238, 0.25
        %v2424 = vmul.f32 %v2266, 0.25
        %v2425 = vmul.f32 %v2268, 0.25
        %v2426 = vmul.f32 %v2296, 0.25
        %v2427 = vmul.f32 %v2298, 0.25
        %v2428 = vmul.f32 %v2326, 0.25
        %v2429 = vmul.f32 %v2328, 0.25
        %v2430 = vmul.f32 %v2356, 0.25
        %v2431 = vmul.f32 %v2358, 0.25
        %v2432 = vmul.f32 %v2386, 0.25
        %v2433 = vmul.f32 %v2388, 0.25
        %v2434 = vmul.f32 %v2416, 0.25
        %v2435 = vmul.f32 %v2418, 0.25
        %v2436 = vsel %vm2189, %v2420, -inf
        %2437 = vmax.xlane.f32.xlu0 %v2436
        %v2438 = vpop.xlane.xlu0 %2437
        %v2439 = vsel %vm2189, %v2421, -inf
        %2440 = vmax.xlane.f32.xlu0 %v2439
        %v2441 = vpop.xlane.xlu0 %2440
        %v2442 = vsel %vm2189, %v2422, -inf
        %2443 = vmax.xlane.f32.xlu0 %v2442
        %v2444 = vpop.xlane.xlu0 %2443
        %v2445 = vsel %vm2189, %v2423, -inf
        %2446 = vmax.xlane.f32.xlu0 %v2445
        %v2447 = vpop.xlane.xlu0 %2446
        %v2448 = vsel %vm2189, %v2424, -inf
        %2449 = vmax.xlane.f32.xlu0 %v2448
        %v2450 = vpop.xlane.xlu0 %2449
        %v2451 = vsel %vm2189, %v2425, -inf
        %2452 = vmax.xlane.f32.xlu0 %v2451
        %v2453 = vpop.xlane.xlu0 %2452
        %v2454 = vsel %vm2189, %v2426, -inf
        %2455 = vmax.xlane.f32.xlu0 %v2454
        %v2456 = vpop.xlane.xlu0 %2455
        %v2457 = vsel %vm2189, %v2427, -inf
        %2458 = vmax.xlane.f32.xlu0 %v2457
        %v2459 = vpop.xlane.xlu0 %2458
        %v2460 = vsel %vm2189, %v2428, -inf
        %2461 = vmax.xlane.f32.xlu0 %v2460
        %v2462 = vpop.xlane.xlu0 %2461
        %v2463 = vsel %vm2189, %v2429, -inf
        %2464 = vmax.xlane.f32.xlu0 %v2463
        %v2465 = vpop.xlane.xlu0 %2464
        %v2466 = vsel %vm2189, %v2430, -inf
        %2467 = vmax.xlane.f32.xlu0 %v2466
        %v2468 = vpop.xlane.xlu0 %2467
        %v2469 = vsel %vm2189, %v2431, -inf
        %2470 = vmax.xlane.f32.xlu0 %v2469
        %v2471 = vpop.xlane.xlu0 %2470
        %v2472 = vsel %vm2189, %v2432, -inf
        %2473 = vmax.xlane.f32.xlu0 %v2472
        %v2474 = vpop.xlane.xlu0 %2473
        %v2475 = vsel %vm2189, %v2433, -inf
        %2476 = vmax.xlane.f32.xlu0 %v2475
        %v2477 = vpop.xlane.xlu0 %2476
        %v2478 = vsel %vm2189, %v2434, -inf
        %2479 = vmax.xlane.f32.xlu0 %v2478
        %v2480 = vpop.xlane.xlu0 %2479
        %v2481 = vsel %vm2189, %v2435, -inf
        %2482 = vmax.xlane.f32.xlu0 %v2481
        %v2483 = vpop.xlane.xlu0 %2482
        %v2484 = vsub.f32 %v2420, %v2438
        %v2485 = vsub.f32 %v2421, %v2441
        %v2486 = vsub.f32 %v2422, %v2444
        %v2487 = vsub.f32 %v2423, %v2447
        %v2488 = vsub.f32 %v2424, %v2450
        %v2489 = vsub.f32 %v2425, %v2453
        %v2490 = vsub.f32 %v2426, %v2456
        %v2491 = vsub.f32 %v2427, %v2459
        %v2492 = vsub.f32 %v2428, %v2462
        %v2493 = vsub.f32 %v2429, %v2465
        %v2494 = vsub.f32 %v2430, %v2468
        %v2495 = vsub.f32 %v2431, %v2471
        %v2496 = vsub.f32 %v2432, %v2474
        %v2497 = vsub.f32 %v2433, %v2477
        %v2498 = vsub.f32 %v2434, %v2480
        %v2499 = vsub.f32 %v2435, %v2483
        %v2500 = vmul.f32 %v2484, 1.442695
        %v2501 = vpow.pop %v2500
        %v2502 = vmul.f32 %v2485, 1.442695
        %v2503 = vpow.pop %v2502
        %v2504 = vmul.f32 %v2486, 1.442695
        %v2505 = vpow.pop %v2504
        %v2506 = vmul.f32 %v2487, 1.442695
        %v2507 = vpow.pop %v2506
        %v2508 = vmul.f32 %v2488, 1.442695
        %v2509 = vpow.pop %v2508
        %v2510 = vmul.f32 %v2489, 1.442695
        %v2511 = vpow.pop %v2510
        %v2512 = vmul.f32 %v2490, 1.442695
        %v2513 = vpow.pop %v2512
        %v2514 = vmul.f32 %v2491, 1.442695
        %v2515 = vpow.pop %v2514
        %v2516 = vmul.f32 %v2492, 1.442695
        %v2517 = vpow.pop %v2516
        %v2518 = vmul.f32 %v2493, 1.442695
        %v2519 = vpow.pop %v2518
        %v2520 = vmul.f32 %v2494, 1.442695
        %v2521 = vpow.pop %v2520
        %v2522 = vmul.f32 %v2495, 1.442695
        %v2523 = vpow.pop %v2522
        %v2524 = vmul.f32 %v2496, 1.442695
        %v2525 = vpow.pop %v2524
        %v2526 = vmul.f32 %v2497, 1.442695
        %v2527 = vpow.pop %v2526
        %v2528 = vmul.f32 %v2498, 1.442695
        %v2529 = vpow.pop %v2528
        %v2530 = vmul.f32 %v2499, 1.442695
        %v2531 = vpow.pop %v2530
        %v2532 = vsel %vm2189, %v2501, 0.0
        %2533 = vadd.xlane.f32.xlu0 %v2532
        %v2534 = vpop.xlane.xlu0 %2533
        %v2535 = vsel %vm2189, %v2503, 0.0
        %2536 = vadd.xlane.f32.xlu0 %v2535
        %v2537 = vpop.xlane.xlu0 %2536
        %v2538 = vsel %vm2189, %v2505, 0.0
        %2539 = vadd.xlane.f32.xlu0 %v2538
        %v2540 = vpop.xlane.xlu0 %2539
        %v2541 = vsel %vm2189, %v2507, 0.0
        %2542 = vadd.xlane.f32.xlu0 %v2541
        %v2543 = vpop.xlane.xlu0 %2542
        %v2544 = vsel %vm2189, %v2509, 0.0
        %2545 = vadd.xlane.f32.xlu0 %v2544
        %v2546 = vpop.xlane.xlu0 %2545
        %v2547 = vsel %vm2189, %v2511, 0.0
        %2548 = vadd.xlane.f32.xlu0 %v2547
        %v2549 = vpop.xlane.xlu0 %2548
        %v2550 = vsel %vm2189, %v2513, 0.0
        %2551 = vadd.xlane.f32.xlu0 %v2550
        %v2552 = vpop.xlane.xlu0 %2551
        %v2553 = vsel %vm2189, %v2515, 0.0
        %2554 = vadd.xlane.f32.xlu0 %v2553
        %v2555 = vpop.xlane.xlu0 %2554
        %v2556 = vsel %vm2189, %v2517, 0.0
        %2557 = vadd.xlane.f32.xlu0 %v2556
        %v2558 = vpop.xlane.xlu0 %2557
        %v2559 = vsel %vm2189, %v2519, 0.0
        %2560 = vadd.xlane.f32.xlu0 %v2559
        %v2561 = vpop.xlane.xlu0 %2560
        %v2562 = vsel %vm2189, %v2521, 0.0
        %2563 = vadd.xlane.f32.xlu0 %v2562
        %v2564 = vpop.xlane.xlu0 %2563
        %v2565 = vsel %vm2189, %v2523, 0.0
        %2566 = vadd.xlane.f32.xlu0 %v2565
        %v2567 = vpop.xlane.xlu0 %2566
        %v2568 = vsel %vm2189, %v2525, 0.0
        %2569 = vadd.xlane.f32.xlu0 %v2568
        %v2570 = vpop.xlane.xlu0 %2569
        %v2571 = vsel %vm2189, %v2527, 0.0
        %2572 = vadd.xlane.f32.xlu0 %v2571
        %v2573 = vpop.xlane.xlu0 %2572
        %v2574 = vsel %vm2189, %v2529, 0.0
        %2575 = vadd.xlane.f32.xlu0 %v2574
        %v2576 = vpop.xlane.xlu0 %2575
        %v2577 = vsel %vm2189, %v2531, 0.0
        %2578 = vadd.xlane.f32.xlu0 %v2577
        %v2579 = vpop.xlane.xlu0 %2578
        %v2580 = vrcp.pop %v2534
        %v2581 = vrcp.pop %v2537
        %v2582 = vrcp.pop %v2540
        %v2583 = vrcp.pop %v2543
        %v2584 = vrcp.pop %v2546
        %v2585 = vrcp.pop %v2549
        %v2586 = vrcp.pop %v2552
        %v2587 = vrcp.pop %v2555
        %v2588 = vrcp.pop %v2558
        %v2589 = vrcp.pop %v2561
        %v2590 = vrcp.pop %v2564
        %v2591 = vrcp.pop %v2567
        %v2592 = vrcp.pop %v2570
        %v2593 = vrcp.pop %v2573
        %v2594 = vrcp.pop %v2576
        %v2595 = vrcp.pop %v2579
        %v2596 = vmul.f32 %v2501, %v2580
        %v2597 = vmul.f32 %v2503, %v2581
        %v2598 = vmul.f32 %v2505, %v2582
        %v2599 = vmul.f32 %v2507, %v2583
        %v2600 = vmul.f32 %v2509, %v2584
        %v2601 = vmul.f32 %v2511, %v2585
        %v2602 = vmul.f32 %v2513, %v2586
        %v2603 = vmul.f32 %v2515, %v2587
        %v2604 = vmul.f32 %v2517, %v2588
        %v2605 = vmul.f32 %v2519, %v2589
        %v2606 = vmul.f32 %v2521, %v2590
        %v2607 = vmul.f32 %v2523, %v2591
        %v2608 = vmul.f32 %v2525, %v2592
        %v2609 = vmul.f32 %v2527, %v2593
        %v2610 = vmul.f32 %v2529, %v2594
        %v2611 = vmul.f32 %v2531, %v2595
        %v2612 = vpack.c.bf16 %v2596, %v2596
        %v2613 = vpack.c.bf16 %v2597, %v2597
        %v2614 = vpack.c.bf16 %v2598, %v2598
        %v2615 = vpack.c.bf16 %v2599, %v2599
        %v2616 = vpack.c.bf16 %v2600, %v2600
        %v2617 = vpack.c.bf16 %v2601, %v2601
        %v2618 = vpack.c.bf16 %v2602, %v2602
        %v2619 = vpack.c.bf16 %v2603, %v2603
        %v2620 = vpack.c.bf16 %v2604, %v2604
        %v2621 = vpack.c.bf16 %v2605, %v2605
        %v2622 = vpack.c.bf16 %v2606, %v2606
        %v2623 = vpack.c.bf16 %v2607, %v2607
        %v2624 = vpack.c.bf16 %v2608, %v2608
        %v2625 = vpack.c.bf16 %v2609, %v2609
        %v2626 = vpack.c.bf16 %v2610, %v2610
        %v2627 = vpack.c.bf16 %v2611, %v2611
        %v2630 = vunpack.c.l.b16 %v2612
        %v2631 = vunpack.c.l.b16 %v2613
        %v2632 = vpack.c.b16 %v2631, %v2630
        %v2635 = vunpack.c.l.b16 %v2163
        %v2636 = vunpack.c.l.b16 %v2164
        %v2637 = vpack.c.b16 %v2636, %v2635
        %v2640 = vsel %vm2189, %v2632, 0
        %2642 = vmatpush.bf16.msra.mxu0 0
        %2643 = vmatpush.bf16.msra.mxu0 0
        %2644 = vmatpush.bf16.msra.mxu0 0
        %2645 = vmatpush.bf16.msra.mxu0 0
        %2646 = vmatpush.bf16.msra.mxu0 0
        %2647 = vmatpush.bf16.msra.mxu0 0
        %2648 = vmatpush.bf16.msra.mxu0 0
        %2649 = vmatpush.bf16.msra.mxu0 %v2637
        %2650 = vmatmul.bf16.gmra.mxu0 %v2640
        %v2651 = vpop.f32.mrf.mxu0
        %v2652 = vadd.f32 0.0, %v2651
        %v2653 = vpop.f32.mrf.mxu0
        %v2654 = vadd.f32 0.0, %v2653
        %2655 = vdwg.mxu0
        %v2658 = vunpack.c.l.b16 %v2614
        %v2659 = vunpack.c.l.b16 %v2615
        %v2660 = vpack.c.b16 %v2659, %v2658
        %v2663 = vunpack.c.l.b16 %v2165
        %v2664 = vunpack.c.l.b16 %v2166
        %v2665 = vpack.c.b16 %v2664, %v2663
        %v2668 = vsel %vm2189, %v2660, 0
        %2670 = vmatpush.bf16.msra.mxu0 0
        %2671 = vmatpush.bf16.msra.mxu0 0
        %2672 = vmatpush.bf16.msra.mxu0 0
        %2673 = vmatpush.bf16.msra.mxu0 0
        %2674 = vmatpush.bf16.msra.mxu0 0
        %2675 = vmatpush.bf16.msra.mxu0 0
        %2676 = vmatpush.bf16.msra.mxu0 0
        %2677 = vmatpush.bf16.msra.mxu0 %v2665
        %2678 = vmatmul.bf16.gmra.mxu0 %v2668
        %v2679 = vpop.f32.mrf.mxu0
        %v2680 = vadd.f32 0.0, %v2679
        %v2681 = vpop.f32.mrf.mxu0
        %v2682 = vadd.f32 0.0, %v2681
        %2683 = vdwg.mxu0
        %v2686 = vunpack.c.l.b16 %v2616
        %v2687 = vunpack.c.l.b16 %v2617
        %v2688 = vpack.c.b16 %v2687, %v2686
        %v2691 = vunpack.c.l.b16 %v2167
        %v2692 = vunpack.c.l.b16 %v2168
        %v2693 = vpack.c.b16 %v2692, %v2691
        %v2696 = vsel %vm2189, %v2688, 0
        %2698 = vmatpush.bf16.msra.mxu0 0
        %2699 = vmatpush.bf16.msra.mxu0 0
        %2700 = vmatpush.bf16.msra.mxu0 0
        %2701 = vmatpush.bf16.msra.mxu0 0
        %2702 = vmatpush.bf16.msra.mxu0 0
        %2703 = vmatpush.bf16.msra.mxu0 0
        %2704 = vmatpush.bf16.msra.mxu0 0
        %2705 = vmatpush.bf16.msra.mxu0 %v2693
        %2706 = vmatmul.bf16.gmra.mxu0 %v2696
        %v2707 = vpop.f32.mrf.mxu0
        %v2708 = vadd.f32 0.0, %v2707
        %v2709 = vpop.f32.mrf.mxu0
        %v2710 = vadd.f32 0.0, %v2709
        %2711 = vdwg.mxu0
        %v2714 = vunpack.c.l.b16 %v2618
        %v2715 = vunpack.c.l.b16 %v2619
        %v2716 = vpack.c.b16 %v2715, %v2714
        %v2719 = vunpack.c.l.b16 %v2169
        %v2720 = vunpack.c.l.b16 %v2170
        %v2721 = vpack.c.b16 %v2720, %v2719
        %v2724 = vsel %vm2189, %v2716, 0
        %2726 = vmatpush.bf16.msra.mxu0 0
        %2727 = vmatpush.bf16.msra.mxu0 0
        %2728 = vmatpush.bf16.msra.mxu0 0
        %2729 = vmatpush.bf16.msra.mxu0 0
        %2730 = vmatpush.bf16.msra.mxu0 0
        %2731 = vmatpush.bf16.msra.mxu0 0
        %2732 = vmatpush.bf16.msra.mxu0 0
        %2733 = vmatpush.bf16.msra.mxu0 %v2721
        %2734 = vmatmul.bf16.gmra.mxu0 %v2724
        %v2735 = vpop.f32.mrf.mxu0
        %v2736 = vadd.f32 0.0, %v2735
        %v2737 = vpop.f32.mrf.mxu0
        %v2738 = vadd.f32 0.0, %v2737
        %2739 = vdwg.mxu0
        %v2742 = vunpack.c.l.b16 %v2620
        %v2743 = vunpack.c.l.b16 %v2621
        %v2744 = vpack.c.b16 %v2743, %v2742
        %v2747 = vunpack.c.l.b16 %v2171
        %v2748 = vunpack.c.l.b16 %v2172
        %v2749 = vpack.c.b16 %v2748, %v2747
        %v2752 = vsel %vm2189, %v2744, 0
        %2754 = vmatpush.bf16.msra.mxu0 0
        %2755 = vmatpush.bf16.msra.mxu0 0
        %2756 = vmatpush.bf16.msra.mxu0 0
        %2757 = vmatpush.bf16.msra.mxu0 0
        %2758 = vmatpush.bf16.msra.mxu0 0
        %2759 = vmatpush.bf16.msra.mxu0 0
        %2760 = vmatpush.bf16.msra.mxu0 0
        %2761 = vmatpush.bf16.msra.mxu0 %v2749
        %2762 = vmatmul.bf16.gmra.mxu0 %v2752
        %v2763 = vpop.f32.mrf.mxu0
        %v2764 = vadd.f32 0.0, %v2763
        %v2765 = vpop.f32.mrf.mxu0
        %v2766 = vadd.f32 0.0, %v2765
        %2767 = vdwg.mxu0
        %v2770 = vunpack.c.l.b16 %v2622
        %v2771 = vunpack.c.l.b16 %v2623
        %v2772 = vpack.c.b16 %v2771, %v2770
        %v2775 = vunpack.c.l.b16 %v2173
        %v2776 = vunpack.c.l.b16 %v2174
        %v2777 = vpack.c.b16 %v2776, %v2775
        %v2780 = vsel %vm2189, %v2772, 0
        %2782 = vmatpush.bf16.msra.mxu0 0
        %2783 = vmatpush.bf16.msra.mxu0 0
        %2784 = vmatpush.bf16.msra.mxu0 0
        %2785 = vmatpush.bf16.msra.mxu0 0
        %2786 = vmatpush.bf16.msra.mxu0 0
        %2787 = vmatpush.bf16.msra.mxu0 0
        %2788 = vmatpush.bf16.msra.mxu0 0
        %2789 = vmatpush.bf16.msra.mxu0 %v2777
        %2790 = vmatmul.bf16.gmra.mxu0 %v2780
        %v2791 = vpop.f32.mrf.mxu0
        %v2792 = vadd.f32 0.0, %v2791
        %v2793 = vpop.f32.mrf.mxu0
        %v2794 = vadd.f32 0.0, %v2793
        %2795 = vdwg.mxu0
        %v2798 = vunpack.c.l.b16 %v2624
        %v2799 = vunpack.c.l.b16 %v2625
        %v2800 = vpack.c.b16 %v2799, %v2798
        %v2803 = vunpack.c.l.b16 %v2175
        %v2804 = vunpack.c.l.b16 %v2176
        %v2805 = vpack.c.b16 %v2804, %v2803
        %v2808 = vsel %vm2189, %v2800, 0
        %2810 = vmatpush.bf16.msra.mxu0 0
        %2811 = vmatpush.bf16.msra.mxu0 0
        %2812 = vmatpush.bf16.msra.mxu0 0
        %2813 = vmatpush.bf16.msra.mxu0 0
        %2814 = vmatpush.bf16.msra.mxu0 0
        %2815 = vmatpush.bf16.msra.mxu0 0
        %2816 = vmatpush.bf16.msra.mxu0 0
        %2817 = vmatpush.bf16.msra.mxu0 %v2805
        %2818 = vmatmul.bf16.gmra.mxu0 %v2808
        %v2819 = vpop.f32.mrf.mxu0
        %v2820 = vadd.f32 0.0, %v2819
        %v2821 = vpop.f32.mrf.mxu0
        %v2822 = vadd.f32 0.0, %v2821
        %2823 = vdwg.mxu0
        %v2826 = vunpack.c.l.b16 %v2626
        %v2827 = vunpack.c.l.b16 %v2627
        %v2828 = vpack.c.b16 %v2827, %v2826
        %v2831 = vunpack.c.l.b16 %v2177
        %v2832 = vunpack.c.l.b16 %v2178
        %v2833 = vpack.c.b16 %v2832, %v2831
        %v2836 = vsel %vm2189, %v2828, 0
        %2838 = vmatpush.bf16.msra.mxu0 0
        %2839 = vmatpush.bf16.msra.mxu0 0
        %2840 = vmatpush.bf16.msra.mxu0 0
        %2841 = vmatpush.bf16.msra.mxu0 0
        %2842 = vmatpush.bf16.msra.mxu0 0
        %2843 = vmatpush.bf16.msra.mxu0 0
        %2844 = vmatpush.bf16.msra.mxu0 0
        %2845 = vmatpush.bf16.msra.mxu0 %v2833
        %2846 = vmatmul.bf16.gmra.mxu0 %v2836
        %v2847 = vpop.f32.mrf.mxu0
        %v2848 = vadd.f32 0.0, %v2847
        %v2849 = vpop.f32.mrf.mxu0
        %v2850 = vadd.f32 0.0, %v2849
        %2851 = vdwg.mxu0
        %v2852 = vpack.c.bf16 %v2652, %v2652
        %v2853 = vpack.c.bf16 %v2654, %v2654
        %v2854 = vpack.c.bf16 %v2680, %v2680
        %v2855 = vpack.c.bf16 %v2682, %v2682
        %v2856 = vpack.c.bf16 %v2708, %v2708
        %v2857 = vpack.c.bf16 %v2710, %v2710
        %v2858 = vpack.c.bf16 %v2736, %v2736
        %v2859 = vpack.c.bf16 %v2738, %v2738
        %v2860 = vpack.c.bf16 %v2764, %v2764
        %v2861 = vpack.c.bf16 %v2766, %v2766
        %v2862 = vpack.c.bf16 %v2792, %v2792
        %v2863 = vpack.c.bf16 %v2794, %v2794
        %v2864 = vpack.c.bf16 %v2820, %v2820
        %v2865 = vpack.c.bf16 %v2822, %v2822
        %v2866 = vpack.c.bf16 %v2848, %v2848
        %v2867 = vpack.c.bf16 %v2850, %v2850
        %v2868 = vld [vmem:[%s4] sm:$0xf]
        %v2869 = vld [vmem:[%s4 + $0x4] sm:$0xf]
        %v2870 = vld [vmem:[%s4 + $0x8] sm:$0xf]
        %v2871 = vld [vmem:[%s4 + $0xc] sm:$0xf]
        %v2872 = vld [vmem:[%s4 + $0x10] sm:$0xf]
        %v2873 = vld [vmem:[%s4 + $0x14] sm:$0xf]
        %v2874 = vld [vmem:[%s4 + $0x18] sm:$0xf]
        %v2875 = vld [vmem:[%s4 + $0x1c] sm:$0xf]
        %v2876 = vld [vmem:[%s4 + $0x20] sm:$0xf]
        %v2877 = vld [vmem:[%s4 + $0x24] sm:$0xf]
        %v2878 = vld [vmem:[%s4 + $0x28] sm:$0xf]
        %v2879 = vld [vmem:[%s4 + $0x2c] sm:$0xf]
        %v2880 = vld [vmem:[%s4 + $0x30] sm:$0xf]
        %v2881 = vld [vmem:[%s4 + $0x34] sm:$0xf]
        %v2882 = vld [vmem:[%s4 + $0x38] sm:$0xf]
        %v2883 = vld [vmem:[%s4 + $0x3c] sm:$0xf]
        %v2886 = vunpack.c.l.b16 %v2852
        %v2887 = vunpack.c.l.b16 %v2853
        %v2888 = vpack.c.b16 %v2887, %v2886
        %v2891 = vunpack.c.l.b16 %v2868
        %v2892 = vunpack.c.l.b16 %v2869
        %v2893 = vpack.c.b16 %v2892, %v2891
        %v2896 = vsel %vm2189, %v2888, 0
        %2898 = vmatpush.bf16.msra.mxu0 0
        %2899 = vmatpush.bf16.msra.mxu0 0
        %2900 = vmatpush.bf16.msra.mxu0 0
        %2901 = vmatpush.bf16.msra.mxu0 0
        %2902 = vmatpush.bf16.msra.mxu0 0
        %2903 = vmatpush.bf16.msra.mxu0 0
        %2904 = vmatpush.bf16.msra.mxu0 0
        %2905 = vmatpush.bf16.msra.mxu0 %v2893
        %2906 = vmatmul.bf16.gmra.mxu0 %v2896
        %v2907 = vpop.f32.mrf.mxu0
        %v2908 = vadd.f32 0.0, %v2907
        %v2909 = vpop.f32.mrf.mxu0
        %v2910 = vadd.f32 0.0, %v2909
        %2911 = vdwg.mxu0
        %v2914 = vunpack.c.l.b16 %v2854
        %v2915 = vunpack.c.l.b16 %v2855
        %v2916 = vpack.c.b16 %v2915, %v2914
        %v2919 = vunpack.c.l.b16 %v2870
        %v2920 = vunpack.c.l.b16 %v2871
        %v2921 = vpack.c.b16 %v2920, %v2919
        %v2924 = vsel %vm2189, %v2916, 0
        %2926 = vmatpush.bf16.msra.mxu0 0
        %2927 = vmatpush.bf16.msra.mxu0 0
        %2928 = vmatpush.bf16.msra.mxu0 0
        %2929 = vmatpush.bf16.msra.mxu0 0
        %2930 = vmatpush.bf16.msra.mxu0 0
        %2931 = vmatpush.bf16.msra.mxu0 0
        %2932 = vmatpush.bf16.msra.mxu0 0
        %2933 = vmatpush.bf16.msra.mxu0 %v2921
        %2934 = vmatmul.bf16.gmra.mxu0 %v2924
        %v2935 = vpop.f32.mrf.mxu0
        %v2936 = vadd.f32 0.0, %v2935
        %v2937 = vpop.f32.mrf.mxu0
        %v2938 = vadd.f32 0.0, %v2937
        %2939 = vdwg.mxu0
        %v2942 = vunpack.c.l.b16 %v2856
        %v2943 = vunpack.c.l.b16 %v2857
        %v2944 = vpack.c.b16 %v2943, %v2942
        %v2947 = vunpack.c.l.b16 %v2872
        %v2948 = vunpack.c.l.b16 %v2873
        %v2949 = vpack.c.b16 %v2948, %v2947
        %v2952 = vsel %vm2189, %v2944, 0
        %2954 = vmatpush.bf16.msra.mxu0 0
        %2955 = vmatpush.bf16.msra.mxu0 0
        %2956 = vmatpush.bf16.msra.mxu0 0
        %2957 = vmatpush.bf16.msra.mxu0 0
        %2958 = vmatpush.bf16.msra.mxu0 0
        %2959 = vmatpush.bf16.msra.mxu0 0
        %2960 = vmatpush.bf16.msra.mxu0 0
        %2961 = vmatpush.bf16.msra.mxu0 %v2949
        %2962 = vmatmul.bf16.gmra.mxu0 %v2952
        %v2963 = vpop.f32.mrf.mxu0
        %v2964 = vadd.f32 0.0, %v2963
        %v2965 = vpop.f32.mrf.mxu0
        %v2966 = vadd.f32 0.0, %v2965
        %2967 = vdwg.mxu0
        %v2970 = vunpack.c.l.b16 %v2858
        %v2971 = vunpack.c.l.b16 %v2859
        %v2972 = vpack.c.b16 %v2971, %v2970
        %v2975 = vunpack.c.l.b16 %v2874
        %v2976 = vunpack.c.l.b16 %v2875
        %v2977 = vpack.c.b16 %v2976, %v2975
        %v2980 = vsel %vm2189, %v2972, 0
        %2982 = vmatpush.bf16.msra.mxu0 0
        %2983 = vmatpush.bf16.msra.mxu0 0
        %2984 = vmatpush.bf16.msra.mxu0 0
        %2985 = vmatpush.bf16.msra.mxu0 0
        %2986 = vmatpush.bf16.msra.mxu0 0
        %2987 = vmatpush.bf16.msra.mxu0 0
        %2988 = vmatpush.bf16.msra.mxu0 0
        %2989 = vmatpush.bf16.msra.mxu0 %v2977
        %2990 = vmatmul.bf16.gmra.mxu0 %v2980
        %v2991 = vpop.f32.mrf.mxu0
        %v2992 = vadd.f32 0.0, %v2991
        %v2993 = vpop.f32.mrf.mxu0
        %v2994 = vadd.f32 0.0, %v2993
        %2995 = vdwg.mxu0
        %v2998 = vunpack.c.l.b16 %v2860
        %v2999 = vunpack.c.l.b16 %v2861
        %v3000 = vpack.c.b16 %v2999, %v2998
        %v3003 = vunpack.c.l.b16 %v2876
        %v3004 = vunpack.c.l.b16 %v2877
        %v3005 = vpack.c.b16 %v3004, %v3003
        %v3008 = vsel %vm2189, %v3000, 0
        %3010 = vmatpush.bf16.msra.mxu0 0
        %3011 = vmatpush.bf16.msra.mxu0 0
        %3012 = vmatpush.bf16.msra.mxu0 0
        %3013 = vmatpush.bf16.msra.mxu0 0
        %3014 = vmatpush.bf16.msra.mxu0 0
        %3015 = vmatpush.bf16.msra.mxu0 0
        %3016 = vmatpush.bf16.msra.mxu0 0
        %3017 = vmatpush.bf16.msra.mxu0 %v3005
        %3018 = vmatmul.bf16.gmra.mxu0 %v3008
        %v3019 = vpop.f32.mrf.mxu0
        %v3020 = vadd.f32 0.0, %v3019
        %v3021 = vpop.f32.mrf.mxu0
        %v3022 = vadd.f32 0.0, %v3021
        %3023 = vdwg.mxu0
        %v3026 = vunpack.c.l.b16 %v2862
        %v3027 = vunpack.c.l.b16 %v2863
        %v3028 = vpack.c.b16 %v3027, %v3026
        %v3031 = vunpack.c.l.b16 %v2878
        %v3032 = vunpack.c.l.b16 %v2879
        %v3033 = vpack.c.b16 %v3032, %v3031
        %v3036 = vsel %vm2189, %v3028, 0
        %3038 = vmatpush.bf16.msra.mxu0 0
        %3039 = vmatpush.bf16.msra.mxu0 0
        %3040 = vmatpush.bf16.msra.mxu0 0
        %3041 = vmatpush.bf16.msra.mxu0 0
        %3042 = vmatpush.bf16.msra.mxu0 0
        %3043 = vmatpush.bf16.msra.mxu0 0
        %3044 = vmatpush.bf16.msra.mxu0 0
        %3045 = vmatpush.bf16.msra.mxu0 %v3033
        %3046 = vmatmul.bf16.gmra.mxu0 %v3036
        %v3047 = vpop.f32.mrf.mxu0
        %v3048 = vadd.f32 0.0, %v3047
        %v3049 = vpop.f32.mrf.mxu0
        %v3050 = vadd.f32 0.0, %v3049
        %3051 = vdwg.mxu0
        %v3054 = vunpack.c.l.b16 %v2864
        %v3055 = vunpack.c.l.b16 %v2865
        %v3056 = vpack.c.b16 %v3055, %v3054
        %v3059 = vunpack.c.l.b16 %v2880
        %v3060 = vunpack.c.l.b16 %v2881
        %v3061 = vpack.c.b16 %v3060, %v3059
        %v3064 = vsel %vm2189, %v3056, 0
        %3066 = vmatpush.bf16.msra.mxu0 0
        %3067 = vmatpush.bf16.msra.mxu0 0
        %3068 = vmatpush.bf16.msra.mxu0 0
        %3069 = vmatpush.bf16.msra.mxu0 0
        %3070 = vmatpush.bf16.msra.mxu0 0
        %3071 = vmatpush.bf16.msra.mxu0 0
        %3072 = vmatpush.bf16.msra.mxu0 0
        %3073 = vmatpush.bf16.msra.mxu0 %v3061
        %3074 = vmatmul.bf16.gmra.mxu0 %v3064
        %v3075 = vpop.f32.mrf.mxu0
        %v3076 = vadd.f32 0.0, %v3075
        %v3077 = vpop.f32.mrf.mxu0
        %v3078 = vadd.f32 0.0, %v3077
        %3079 = vdwg.mxu0
        %v3082 = vunpack.c.l.b16 %v2866
        %v3083 = vunpack.c.l.b16 %v2867
        %v3084 = vpack.c.b16 %v3083, %v3082
        %v3087 = vunpack.c.l.b16 %v2882
        %v3088 = vunpack.c.l.b16 %v2883
        %v3089 = vpack.c.b16 %v3088, %v3087
        %v3092 = vsel %vm2189, %v3084, 0
        %3094 = vmatpush.bf16.msra.mxu0 0
        %3095 = vmatpush.bf16.msra.mxu0 0
        %3096 = vmatpush.bf16.msra.mxu0 0
        %3097 = vmatpush.bf16.msra.mxu0 0
        %3098 = vmatpush.bf16.msra.mxu0 0
        %3099 = vmatpush.bf16.msra.mxu0 0
        %3100 = vmatpush.bf16.msra.mxu0 0
        %3101 = vmatpush.bf16.msra.mxu0 %v3089
        %3102 = vmatmul.bf16.gmra.mxu0 %v3092
        %v3103 = vpop.f32.mrf.mxu0
        %v3104 = vadd.f32 0.0, %v3103
        %v3105 = vpop.f32.mrf.mxu0
        %v3106 = vadd.f32 0.0, %v3105
        %3107 = vdwg.mxu0
        %v3108 = vadd.f32 %v2908, %v2936
        %v3109 = vadd.f32 %v3108, %v2964
        %v3110 = vadd.f32 %v3109, %v2992
        %v3111 = vadd.f32 %v3110, %v3020
        %v3112 = vadd.f32 %v3111, %v3048
        %v3113 = vadd.f32 %v3112, %v3076
        %v3114 = vadd.f32 %v3113, %v3104
        %v3115 = vadd.f32 %v2910, %v2938
        %v3116 = vadd.f32 %v3115, %v2966
        %v3117 = vadd.f32 %v3116, %v2994
        %v3118 = vadd.f32 %v3117, %v3022
        %v3119 = vadd.f32 %v3118, %v3050
        %v3120 = vadd.f32 %v3119, %v3078
        %v3121 = vadd.f32 %v3120, %v3106
        %v3122 = vld [vmem:[%s5] sm:$0x1]
        %v3124 = vperm.slane %v3122, 0
        %v3126 = vadd.f32 %v3114, %v3124
        %v3127 = vadd.f32 %v3121, %v3124
        %3128 = vst [vmem:[%s244] sm:$0xff] %v3126
        %3129 = vst [vmem:[%s244 + $0x8] sm:$0xff] %v3127
        %s3130 = sand.u32 %s159, 1
        %s3131 = scalar_lea.sflag [#allocation3], %s3130
        %s3132 = sand.u32 %s159, 1
        %s3133 = smul.addr %s3132, 16
        %s3134 = scalar_lea.vmem [#allocation2], %s3133
        // Predicated region
        $region45: #{attention_forward.1} parent=43 // pred_check
          %p3135 = pneg %p169
        $region46: #{attention_forward.1} parent=43 // pred_check_branch
          %3137 = sbr.rel (%p3135) target = $region48
        $region47: #{attention_forward.1} parent=43 // pred_region
          %3139 = vsyncadd %s3131, 0
          %s3140 = smul.addr %s20, 2
          %s3141 = smul.addr %s3140, 8
          %s3142 = scalar_lea.hbm %s6, %s3141
          %s3143 = sshll.u32 %s3134, 4
          %s3144 = int_to_ptr.vmem [resolvable:$true] %s3143
          %s3145 = sshll.u32 %s3142, 4
          %s3146 = int_to_ptr.hbm [resolvable:$true] %s3145
          %3151 = dma.vmem_to_hbm [thread:$0]  %s3144, 256, %s3146, %s3131, 128, 128, 8
        $region48: #{attention_forward.1} parent=43 // pred_fallthru
          _
      $region44: #{attention_forward.1} parent=5 // pred_fallthru
        _
      %p3152 = scmp.le.s32.totalorder 2, %s15
      // Predicated region
      $region49: #{attention_forward.1} parent=5 // pred_check
        %p3153 = pneg %p3152
      $region50: #{attention_forward.1} parent=5 // pred_check_branch
        %3155 = sbr.rel (%p3153) target = $region52
      $region51: #{attention_forward.1} parent=5 // pred_region
        %s3156 = ssub.s32 %s15, 2
        // Predicated region
        $region53: #{attention_forward.1} parent=51 // pred_check
          %p3157 = pneg %p175
        $region54: #{attention_forward.1} parent=51 // pred_check_branch
          %3159 = sbr.rel (%p3157) target = $region56
        $region55: #{attention_forward.1} parent=51 // pred_region
          %s3160 = sand.u32 %s160, 1
          %s3161 = scalar_lea.sflag [#allocation3], %s3160
          %s3162 = sand.u32 %s160, 1
          %s3163 = smul.addr %s3162, 16
          %s3164 = scalar_lea.vmem [#allocation2], %s3163
          %3166 = dma.done %s3161, 256
        $region56: #{attention_forward.1} parent=51 // pred_fallthru
          _
      $region52: #{attention_forward.1} parent=5 // pred_fallthru
        _
    $region6: #{attention_forward.1} parent=1 // loop_footer
      %s19 = sadd.s32 1, %s15
    $region7: #{attention_forward.1} parent=1 // loop_footer_branch
      %14 = sbr.rel target = $region3
    $region8: #{attention_forward.1} parent=1 // loop_exit
      _
    %3167 = vsyncpa [#allocation3], 1
    %s3168 = scalar_lea.sflag [#allocation3], 1
    %3169 = vsyncpa %s3168, 1

</llo_original>
